<compile_context>
chip_gen: v7x
topology: tpu7x:2x2x1
jax: 0.10.0
libtpu: 0.0.40
codegen_flags: <defaults>
</compile_context>

<pallas_src>
import functools

import jax
import jax.numpy as jnp
import numpy as np
from jax import lax
from jax.experimental import pallas as pl
from jax.experimental.pallas import tpu as pltpu

_LANES = 128
_BLOCK_ROWS = 32      # rows per inner-loop block: 4 f32 vregs per channel (ILP, no spills)
_TILE_ROW_CAP = 512   # rows per grid tile: 3*512*128*4 B = 768 KiB (double-buffered ~1.5 MiB)


def _cdiv(a, b):
    return -(-a // b)


def _round_up(a, b):
    return _cdiv(a, b) * b


def _nps_kernel(tab_ref, patch_ref, out_ref, *, n_colors, n_blocks, block_rows):
    """One spatial tile.

    tab_ref  : SMEM (4*n_colors,) f32 = per color [-2*c'_r, -2*c'_g, -2*c'_b, |c'|^2+1e-6]
               with c' = color - 1e-6 (folds the +1e-6 of (patch - color + 1e-6)).
    patch_ref: VMEM (3, tile_rows, 128) f32 tile of the flattened patch.
    out_ref  : VMEM (8, 128) f32 lane-dense per-tile partial sums.
    """

    def block_body(kb, acc):
        row0 = pl.multiple_of(kb * block_rows, block_rows)
        r = patch_ref[0, pl.ds(row0, block_rows), :]        # (block_rows, 128)
        g = patch_ref[1, pl.ds(row0, block_rows), :]
        b = patch_ref[2, pl.ds(row0, block_rows), :]

        # Color-independent part, paid once per pixel (amortized over all colors).
        p2 = r * r + g * g + b * b

        def q_of(c):
            o = 4 * c
            return (r * tab_ref[o] + g * tab_ref[o + 1]) + (
                b * tab_ref[o + 2] + tab_ref[o + 3])

        # Running minimum over the color table (unrolled, vreg-resident, VPU only).
        qmin = q_of(0)
        for c in range(1, n_colors):
            qmin = jnp.minimum(qmin, q_of(c))

        # Single deferred sqrt pass (EUP); clamp guards fp cancellation when pixel ~= color.
        dist = jnp.sqrt(jnp.maximum(p2 + qmin, 0.0))

        # (block_rows, 128) -> (8, 128) partial sums: pure vreg-wise VALU adds.
        part = dist[0:8, :]
        for j in range(1, block_rows // 8):
            part = part + dist[j * 8:(j + 1) * 8, :]
        return acc + part

    acc = lax.fori_loop(0, n_blocks, block_body,
                        jnp.zeros((8, _LANES), jnp.float32))
    out_ref[...] = acc


def nps_score(adv_patch, printability_array, w: float = 0.01):
    """Pallas implementation of NPSCalculator.forward."""
    adv_patch = jnp.asarray(adv_patch, jnp.float32)
    c, h, w_px = adv_patch.shape
    assert c == 3, "adv_patch must be (3, H, W)"

    pa = jnp.asarray(printability_array, jnp.float32)
    if pa.ndim == 4:
        # The module's printability array is a spatially constant broadcast of the
        # (N, 3) color triplets (np.full per channel), so one pixel carries all the info.
        colors = pa[:, :, 0, 0]
    else:
        colors = pa                                        # already (N, 3)
    n_colors = int(colors.shape[0])

    # Expanded-quadratic color table (SMEM, 4 scalars per color).
    cshift = colors - jnp.float32(1e-6)                    # fold +1e-6 of (p - c + 1e-6)
    neg2c = jnp.float32(-2.0) * cshift                     # (N, 3)
    kvec = jnp.sum(cshift * cshift, axis=1) + jnp.float32(1e-6)   # (N,)
    tab = jnp.concatenate([neg2c, kvec[:, None]], axis=1).reshape(-1)  # (4N,)

    # Tile sizing: big tiles to amortize grid-step overhead, even tile count (>1) so
    # both v7x TensorCores get work, rows aligned to the 32-row inner block.
    p_total = h * w_px
    rows = _cdiv(p_total, _LANES)
    rows_a = _round_up(rows, _BLOCK_ROWS)
    num_tiles = _cdiv(rows_a, _TILE_ROW_CAP)
    if num_tiles == 1 and rows_a >= 256:
        num_tiles = 2                                      # medium patches: 2-way split
    if num_tiles > 1 and num_tiles % 2:
        num_tiles += 1                                     # even split for 2-TC megacore
    tile_rows = _round_up(_cdiv(rows_a, num_tiles), _BLOCK_ROWS)
    rows_pad = num_tiles * tile_rows
    n_blocks = tile_rows // _BLOCK_ROWS
    n_pad = rows_pad * _LANES - p_total

    patch_flat = adv_patch.reshape(c, p_total)
    if n_pad:
        # TODO(synk): for huge patches a split bulk/tail launch would avoid this copy.
        patch_flat = jnp.pad(patch_flat, ((0, 0), (0, n_pad)))
    patch3d = patch_flat.reshape(c, rows_pad, _LANES)

    kernel = functools.partial(_nps_kernel, n_colors=n_colors,
                               n_blocks=n_blocks, block_rows=_BLOCK_ROWS)

    partial_sums = pl.pallas_call(
        kernel,
        out_shape=jax.ShapeDtypeStruct((num_tiles * 8, _LANES), jnp.float32),
        grid_spec=pltpu.PrefetchScalarGridSpec(
            num_scalar_prefetch=0,
            grid=(num_tiles,),
            in_specs=[
                pl.BlockSpec(memory_space=pltpu.MemorySpace.SMEM),   # color table
                pl.BlockSpec((c, tile_rows, _LANES), lambda i: (0, i, 0)),
            ],
            out_specs=pl.BlockSpec((8, _LANES), lambda i: (i, 0)),
        ),
        compiler_params=pltpu.CompilerParams(
            dimension_semantics=("parallel",)),
    )(tab, patch3d)

    total = jnp.sum(partial_sums)
    if n_pad:
        # Padded pixels are exactly (0,0,0): the kernel adds sqrt(min_c k_c) for each one
        # (all intermediate fp ops are exact for zero inputs), so subtract them back here.
        total = total - jnp.float32(n_pad) * jnp.sqrt(jnp.min(kvec))

    return total * (float(w) / float(adv_patch.size))      # nps / numel(adv_patch) * w


def make_printability_array(side: int, n_colors: int = 30):
    """Deterministic synthetic replacement for reading 30values.txt."""
    t = np.linspace(0.0, 1.0, n_colors, dtype=np.float32)
    triplets = np.stack([t, 1.0 - t, 0.25 + 0.5 * t], axis=1)          # (N, 3)
    pa = np.broadcast_to(triplets[:, :, None, None],
                         (n_colors, 3, side, side)).astype(np.float32)
    return jnp.asarray(np.ascontiguousarray(pa))


def nps_ref(adv_patch, printability_array, w: float = 0.01):
    """Pure-JAX reference mirroring the PyTorch forward."""
    d = adv_patch[None, ...] - printability_array + 1e-6
    d = jnp.sum(d * d, axis=1) + 1e-6
    d = jnp.sqrt(d)
    d_min = jnp.min(d, axis=0)
    s = jnp.sum(d_min)
    return s / adv_patch.size * w


if __name__ == "__main__":
    side = 16
    n_colors = 30
    w = 0.01

    key = jax.random.PRNGKey(0)
    adv_patch = jax.random.uniform(key, (3, side, side), dtype=jnp.float32)

    printability_array = make_printability_array(side, n_colors)

    score_fn = jax.jit(functools.partial(nps_score, w=w))
    got = jax.block_until_ready(score_fn(adv_patch, printability_array))

    want = jax.block_until_ready(nps_ref(adv_patch, printability_array, w=w))
    # Slightly relaxed atol vs. the naive-form kernel: the expanded quadratic
    # introduces ulp-level cancellation per pixel (acceptable for a loss scalar).
    np.testing.assert_allclose(np.asarray(got), np.asarray(want),
                               rtol=1e-5, atol=5e-7)

    print("KERNEL_OK")
</pallas_src>

<mosaic_0001>
module attributes {stable_mosaic.version = 11 : i64} {
  func.func @_nps_kernel(%arg0: i32, %arg1: memref<120xf32, #tpu.memory_space<smem>>, %arg2: memref<3x32x128xf32, #tpu.memory_space<vmem>>, %arg3: memref<8x128xf32, #tpu.memory_space<vmem>>) attributes {dimension_semantics = [#tpu.dimension_semantics<parallel>], iteration_bounds = array<i64: 1>, scalar_prefetch = 0 : i64, scratch_operands = 0 : i64, tpu.core_type = #tpu.core_type<tc>, window_params = [{transform_indices = @transform_0, window_bounds = array<i64: 120>}, {transform_indices = @transform_1, window_bounds = array<i64: 3, 32, 128>}, {transform_indices = @transform_2, window_bounds = array<i64: 8, 128>}]} {
    %cst = arith.constant 0.000000e+00 : f32
    %0 = vector.broadcast %cst : f32 to vector<8x128xf32>
    %c0_i32 = arith.constant 0 : i32
    %c32_i32 = arith.constant 32 : i32
    %1 = arith.muli %c0_i32, %c32_i32 : i32
    %2 = tpu.assume_multiple %1, 32 : i32
    %c0 = arith.constant 0 : index
    %3 = arith.index_cast %2 : i32 to index
    %c0_0 = arith.constant 0 : index
    %4 = vector.load %arg2[%c0, %3, %c0_0] : memref<3x32x128xf32, #tpu.memory_space<vmem>>, vector<1x32x128xf32>
    %5 = vector.shape_cast %4 : vector<1x32x128xf32> to vector<32x128xf32>
    %c1 = arith.constant 1 : index
    %6 = arith.index_cast %2 : i32 to index
    %c0_1 = arith.constant 0 : index
    %7 = vector.load %arg2[%c1, %6, %c0_1] : memref<3x32x128xf32, #tpu.memory_space<vmem>>, vector<1x32x128xf32>
    %8 = vector.shape_cast %7 : vector<1x32x128xf32> to vector<32x128xf32>
    %c2 = arith.constant 2 : index
    %9 = arith.index_cast %2 : i32 to index
    %c0_2 = arith.constant 0 : index
    %10 = vector.load %arg2[%c2, %9, %c0_2] : memref<3x32x128xf32, #tpu.memory_space<vmem>>, vector<1x32x128xf32>
    %11 = vector.shape_cast %10 : vector<1x32x128xf32> to vector<32x128xf32>
    %12 = arith.mulf %5, %5 : vector<32x128xf32>
    %13 = arith.mulf %8, %8 : vector<32x128xf32>
    %14 = arith.addf %12, %13 : vector<32x128xf32>
    %15 = arith.mulf %11, %11 : vector<32x128xf32>
    %16 = arith.addf %14, %15 : vector<32x128xf32>
    %c0_3 = arith.constant 0 : index
    %17 = memref.load %arg1[%c0_3] : memref<120xf32, #tpu.memory_space<smem>>
    %18 = vector.broadcast %17 : f32 to vector<32x128xf32>
    %19 = arith.mulf %5, %18 : vector<32x128xf32>
    %c1_4 = arith.constant 1 : index
    %20 = memref.load %arg1[%c1_4] : memref<120xf32, #tpu.memory_space<smem>>
    %21 = vector.broadcast %20 : f32 to vector<32x128xf32>
    %22 = arith.mulf %8, %21 : vector<32x128xf32>
    %23 = arith.addf %19, %22 : vector<32x128xf32>
    %c2_5 = arith.constant 2 : index
    %24 = memref.load %arg1[%c2_5] : memref<120xf32, #tpu.memory_space<smem>>
    %25 = vector.broadcast %24 : f32 to vector<32x128xf32>
    %26 = arith.mulf %11, %25 : vector<32x128xf32>
    %c3 = arith.constant 3 : index
    %27 = memref.load %arg1[%c3] : memref<120xf32, #tpu.memory_space<smem>>
    %28 = vector.broadcast %27 : f32 to vector<32x128xf32>
    %29 = arith.addf %26, %28 : vector<32x128xf32>
    %30 = arith.addf %23, %29 : vector<32x128xf32>
    %c4 = arith.constant 4 : index
    %31 = memref.load %arg1[%c4] : memref<120xf32, #tpu.memory_space<smem>>
    %32 = vector.broadcast %31 : f32 to vector<32x128xf32>
    %33 = arith.mulf %5, %32 : vector<32x128xf32>
    %c5 = arith.constant 5 : index
    %34 = memref.load %arg1[%c5] : memref<120xf32, #tpu.memory_space<smem>>
    %35 = vector.broadcast %34 : f32 to vector<32x128xf32>
    %36 = arith.mulf %8, %35 : vector<32x128xf32>
    %37 = arith.addf %33, %36 : vector<32x128xf32>
    %c6 = arith.constant 6 : index
    %38 = memref.load %arg1[%c6] : memref<120xf32, #tpu.memory_space<smem>>
    %39 = vector.broadcast %38 : f32 to vector<32x128xf32>
    %40 = arith.mulf %11, %39 : vector<32x128xf32>
    %c7 = arith.constant 7 : index
    %41 = memref.load %arg1[%c7] : memref<120xf32, #tpu.memory_space<smem>>
    %42 = vector.broadcast %41 : f32 to vector<32x128xf32>
    %43 = arith.addf %40, %42 : vector<32x128xf32>
    %44 = arith.addf %37, %43 : vector<32x128xf32>
    %45 = arith.minimumf %30, %44 : vector<32x128xf32>
    %c8 = arith.constant 8 : index
    %46 = memref.load %arg1[%c8] : memref<120xf32, #tpu.memory_space<smem>>
    %47 = vector.broadcast %46 : f32 to vector<32x128xf32>
    %48 = arith.mulf %5, %47 : vector<32x128xf32>
    %c9 = arith.constant 9 : index
    %49 = memref.load %arg1[%c9] : memref<120xf32, #tpu.memory_space<smem>>
    %50 = vector.broadcast %49 : f32 to vector<32x128xf32>
    %51 = arith.mulf %8, %50 : vector<32x128xf32>
    %52 = arith.addf %48, %51 : vector<32x128xf32>
    %c10 = arith.constant 10 : index
    %53 = memref.load %arg1[%c10] : memref<120xf32, #tpu.memory_space<smem>>
    %54 = vector.broadcast %53 : f32 to vector<32x128xf32>
    %55 = arith.mulf %11, %54 : vector<32x128xf32>
    %c11 = arith.constant 11 : index
    %56 = memref.load %arg1[%c11] : memref<120xf32, #tpu.memory_space<smem>>
    %57 = vector.broadcast %56 : f32 to vector<32x128xf32>
    %58 = arith.addf %55, %57 : vector<32x128xf32>
    %59 = arith.addf %52, %58 : vector<32x128xf32>
    %60 = arith.minimumf %45, %59 : vector<32x128xf32>
    %c12 = arith.constant 12 : index
    %61 = memref.load %arg1[%c12] : memref<120xf32, #tpu.memory_space<smem>>
    %62 = vector.broadcast %61 : f32 to vector<32x128xf32>
    %63 = arith.mulf %5, %62 : vector<32x128xf32>
    %c13 = arith.constant 13 : index
    %64 = memref.load %arg1[%c13] : memref<120xf32, #tpu.memory_space<smem>>
    %65 = vector.broadcast %64 : f32 to vector<32x128xf32>
    %66 = arith.mulf %8, %65 : vector<32x128xf32>
    %67 = arith.addf %63, %66 : vector<32x128xf32>
    %c14 = arith.constant 14 : index
    %68 = memref.load %arg1[%c14] : memref<120xf32, #tpu.memory_space<smem>>
    %69 = vector.broadcast %68 : f32 to vector<32x128xf32>
    %70 = arith.mulf %11, %69 : vector<32x128xf32>
    %c15 = arith.constant 15 : index
    %71 = memref.load %arg1[%c15] : memref<120xf32, #tpu.memory_space<smem>>
    %72 = vector.broadcast %71 : f32 to vector<32x128xf32>
    %73 = arith.addf %70, %72 : vector<32x128xf32>
    %74 = arith.addf %67, %73 : vector<32x128xf32>
    %75 = arith.minimumf %60, %74 : vector<32x128xf32>
    %c16 = arith.constant 16 : index
    %76 = memref.load %arg1[%c16] : memref<120xf32, #tpu.memory_space<smem>>
    %77 = vector.broadcast %76 : f32 to vector<32x128xf32>
    %78 = arith.mulf %5, %77 : vector<32x128xf32>
    %c17 = arith.constant 17 : index
    %79 = memref.load %arg1[%c17] : memref<120xf32, #tpu.memory_space<smem>>
    %80 = vector.broadcast %79 : f32 to vector<32x128xf32>
    %81 = arith.mulf %8, %80 : vector<32x128xf32>
    %82 = arith.addf %78, %81 : vector<32x128xf32>
    %c18 = arith.constant 18 : index
    %83 = memref.load %arg1[%c18] : memref<120xf32, #tpu.memory_space<smem>>
    %84 = vector.broadcast %83 : f32 to vector<32x128xf32>
    %85 = arith.mulf %11, %84 : vector<32x128xf32>
    %c19 = arith.constant 19 : index
    %86 = memref.load %arg1[%c19] : memref<120xf32, #tpu.memory_space<smem>>
    %87 = vector.broadcast %86 : f32 to vector<32x128xf32>
    %88 = arith.addf %85, %87 : vector<32x128xf32>
    %89 = arith.addf %82, %88 : vector<32x128xf32>
    %90 = arith.minimumf %75, %89 : vector<32x128xf32>
    %c20 = arith.constant 20 : index
    %91 = memref.load %arg1[%c20] : memref<120xf32, #tpu.memory_space<smem>>
    %92 = vector.broadcast %91 : f32 to vector<32x128xf32>
    %93 = arith.mulf %5, %92 : vector<32x128xf32>
    %c21 = arith.constant 21 : index
    %94 = memref.load %arg1[%c21] : memref<120xf32, #tpu.memory_space<smem>>
    %95 = vector.broadcast %94 : f32 to vector<32x128xf32>
    %96 = arith.mulf %8, %95 : vector<32x128xf32>
    %97 = arith.addf %93, %96 : vector<32x128xf32>
    %c22 = arith.constant 22 : index
    %98 = memref.load %arg1[%c22] : memref<120xf32, #tpu.memory_space<smem>>
    %99 = vector.broadcast %98 : f32 to vector<32x128xf32>
    %100 = arith.mulf %11, %99 : vector<32x128xf32>
    %c23 = arith.constant 23 : index
    %101 = memref.load %arg1[%c23] : memref<120xf32, #tpu.memory_space<smem>>
    %102 = vector.broadcast %101 : f32 to vector<32x128xf32>
    %103 = arith.addf %100, %102 : vector<32x128xf32>
    %104 = arith.addf %97, %103 : vector<32x128xf32>
    %105 = arith.minimumf %90, %104 : vector<32x128xf32>
    %c24 = arith.constant 24 : index
    %106 = memref.load %arg1[%c24] : memref<120xf32, #tpu.memory_space<smem>>
    %107 = vector.broadcast %106 : f32 to vector<32x128xf32>
    %108 = arith.mulf %5, %107 : vector<32x128xf32>
    %c25 = arith.constant 25 : index
    %109 = memref.load %arg1[%c25] : memref<120xf32, #tpu.memory_space<smem>>
    %110 = vector.broadcast %109 : f32 to vector<32x128xf32>
    %111 = arith.mulf %8, %110 : vector<32x128xf32>
    %112 = arith.addf %108, %111 : vector<32x128xf32>
    %c26 = arith.constant 26 : index
    %113 = memref.load %arg1[%c26] : memref<120xf32, #tpu.memory_space<smem>>
    %114 = vector.broadcast %113 : f32 to vector<32x128xf32>
    %115 = arith.mulf %11, %114 : vector<32x128xf32>
    %c27 = arith.constant 27 : index
    %116 = memref.load %arg1[%c27] : memref<120xf32, #tpu.memory_space<smem>>
    %117 = vector.broadcast %116 : f32 to vector<32x128xf32>
    %118 = arith.addf %115, %117 : vector<32x128xf32>
    %119 = arith.addf %112, %118 : vector<32x128xf32>
    %120 = arith.minimumf %105, %119 : vector<32x128xf32>
    %c28 = arith.constant 28 : index
    %121 = memref.load %arg1[%c28] : memref<120xf32, #tpu.memory_space<smem>>
    %122 = vector.broadcast %121 : f32 to vector<32x128xf32>
    %123 = arith.mulf %5, %122 : vector<32x128xf32>
    %c29 = arith.constant 29 : index
    %124 = memref.load %arg1[%c29] : memref<120xf32, #tpu.memory_space<smem>>
    %125 = vector.broadcast %124 : f32 to vector<32x128xf32>
    %126 = arith.mulf %8, %125 : vector<32x128xf32>
    %127 = arith.addf %123, %126 : vector<32x128xf32>
    %c30 = arith.constant 30 : index
    %128 = memref.load %arg1[%c30] : memref<120xf32, #tpu.memory_space<smem>>
    %129 = vector.broadcast %128 : f32 to vector<32x128xf32>
    %130 = arith.mulf %11, %129 : vector<32x128xf32>
    %c31 = arith.constant 31 : index
    %131 = memref.load %arg1[%c31] : memref<120xf32, #tpu.memory_space<smem>>
    %132 = vector.broadcast %131 : f32 to vector<32x128xf32>
    %133 = arith.addf %130, %132 : vector<32x128xf32>
    %134 = arith.addf %127, %133 : vector<32x128xf32>
    %135 = arith.minimumf %120, %134 : vector<32x128xf32>
    %c32 = arith.constant 32 : index
    %136 = memref.load %arg1[%c32] : memref<120xf32, #tpu.memory_space<smem>>
    %137 = vector.broadcast %136 : f32 to vector<32x128xf32>
    %138 = arith.mulf %5, %137 : vector<32x128xf32>
    %c33 = arith.constant 33 : index
    %139 = memref.load %arg1[%c33] : memref<120xf32, #tpu.memory_space<smem>>
    %140 = vector.broadcast %139 : f32 to vector<32x128xf32>
    %141 = arith.mulf %8, %140 : vector<32x128xf32>
    %142 = arith.addf %138, %141 : vector<32x128xf32>
    %c34 = arith.constant 34 : index
    %143 = memref.load %arg1[%c34] : memref<120xf32, #tpu.memory_space<smem>>
    %144 = vector.broadcast %143 : f32 to vector<32x128xf32>
    %145 = arith.mulf %11, %144 : vector<32x128xf32>
    %c35 = arith.constant 35 : index
    %146 = memref.load %arg1[%c35] : memref<120xf32, #tpu.memory_space<smem>>
    %147 = vector.broadcast %146 : f32 to vector<32x128xf32>
    %148 = arith.addf %145, %147 : vector<32x128xf32>
    %149 = arith.addf %142, %148 : vector<32x128xf32>
    %150 = arith.minimumf %135, %149 : vector<32x128xf32>
    %c36 = arith.constant 36 : index
    %151 = memref.load %arg1[%c36] : memref<120xf32, #tpu.memory_space<smem>>
    %152 = vector.broadcast %151 : f32 to vector<32x128xf32>
    %153 = arith.mulf %5, %152 : vector<32x128xf32>
    %c37 = arith.constant 37 : index
    %154 = memref.load %arg1[%c37] : memref<120xf32, #tpu.memory_space<smem>>
    %155 = vector.broadcast %154 : f32 to vector<32x128xf32>
    %156 = arith.mulf %8, %155 : vector<32x128xf32>
    %157 = arith.addf %153, %156 : vector<32x128xf32>
    %c38 = arith.constant 38 : index
    %158 = memref.load %arg1[%c38] : memref<120xf32, #tpu.memory_space<smem>>
    %159 = vector.broadcast %158 : f32 to vector<32x128xf32>
    %160 = arith.mulf %11, %159 : vector<32x128xf32>
    %c39 = arith.constant 39 : index
    %161 = memref.load %arg1[%c39] : memref<120xf32, #tpu.memory_space<smem>>
    %162 = vector.broadcast %161 : f32 to vector<32x128xf32>
    %163 = arith.addf %160, %162 : vector<32x128xf32>
    %164 = arith.addf %157, %163 : vector<32x128xf32>
    %165 = arith.minimumf %150, %164 : vector<32x128xf32>
    %c40 = arith.constant 40 : index
    %166 = memref.load %arg1[%c40] : memref<120xf32, #tpu.memory_space<smem>>
    %167 = vector.broadcast %166 : f32 to vector<32x128xf32>
    %168 = arith.mulf %5, %167 : vector<32x128xf32>
    %c41 = arith.constant 41 : index
    %169 = memref.load %arg1[%c41] : memref<120xf32, #tpu.memory_space<smem>>
    %170 = vector.broadcast %169 : f32 to vector<32x128xf32>
    %171 = arith.mulf %8, %170 : vector<32x128xf32>
    %172 = arith.addf %168, %171 : vector<32x128xf32>
    %c42 = arith.constant 42 : index
    %173 = memref.load %arg1[%c42] : memref<120xf32, #tpu.memory_space<smem>>
    %174 = vector.broadcast %173 : f32 to vector<32x128xf32>
    %175 = arith.mulf %11, %174 : vector<32x128xf32>
    %c43 = arith.constant 43 : index
    %176 = memref.load %arg1[%c43] : memref<120xf32, #tpu.memory_space<smem>>
    %177 = vector.broadcast %176 : f32 to vector<32x128xf32>
    %178 = arith.addf %175, %177 : vector<32x128xf32>
    %179 = arith.addf %172, %178 : vector<32x128xf32>
    %180 = arith.minimumf %165, %179 : vector<32x128xf32>
    %c44 = arith.constant 44 : index
    %181 = memref.load %arg1[%c44] : memref<120xf32, #tpu.memory_space<smem>>
    %182 = vector.broadcast %181 : f32 to vector<32x128xf32>
    %183 = arith.mulf %5, %182 : vector<32x128xf32>
    %c45 = arith.constant 45 : index
    %184 = memref.load %arg1[%c45] : memref<120xf32, #tpu.memory_space<smem>>
    %185 = vector.broadcast %184 : f32 to vector<32x128xf32>
    %186 = arith.mulf %8, %185 : vector<32x128xf32>
    %187 = arith.addf %183, %186 : vector<32x128xf32>
    %c46 = arith.constant 46 : index
    %188 = memref.load %arg1[%c46] : memref<120xf32, #tpu.memory_space<smem>>
    %189 = vector.broadcast %188 : f32 to vector<32x128xf32>
    %190 = arith.mulf %11, %189 : vector<32x128xf32>
    %c47 = arith.constant 47 : index
    %191 = memref.load %arg1[%c47] : memref<120xf32, #tpu.memory_space<smem>>
    %192 = vector.broadcast %191 : f32 to vector<32x128xf32>
    %193 = arith.addf %190, %192 : vector<32x128xf32>
    %194 = arith.addf %187, %193 : vector<32x128xf32>
    %195 = arith.minimumf %180, %194 : vector<32x128xf32>
    %c48 = arith.constant 48 : index
    %196 = memref.load %arg1[%c48] : memref<120xf32, #tpu.memory_space<smem>>
    %197 = vector.broadcast %196 : f32 to vector<32x128xf32>
    %198 = arith.mulf %5, %197 : vector<32x128xf32>
    %c49 = arith.constant 49 : index
    %199 = memref.load %arg1[%c49] : memref<120xf32, #tpu.memory_space<smem>>
    %200 = vector.broadcast %199 : f32 to vector<32x128xf32>
    %201 = arith.mulf %8, %200 : vector<32x128xf32>
    %202 = arith.addf %198, %201 : vector<32x128xf32>
    %c50 = arith.constant 50 : index
    %203 = memref.load %arg1[%c50] : memref<120xf32, #tpu.memory_space<smem>>
    %204 = vector.broadcast %203 : f32 to vector<32x128xf32>
    %205 = arith.mulf %11, %204 : vector<32x128xf32>
    %c51 = arith.constant 51 : index
    %206 = memref.load %arg1[%c51] : memref<120xf32, #tpu.memory_space<smem>>
    %207 = vector.broadcast %206 : f32 to vector<32x128xf32>
    %208 = arith.addf %205, %207 : vector<32x128xf32>
    %209 = arith.addf %202, %208 : vector<32x128xf32>
    %210 = arith.minimumf %195, %209 : vector<32x128xf32>
    %c52 = arith.constant 52 : index
    %211 = memref.load %arg1[%c52] : memref<120xf32, #tpu.memory_space<smem>>
    %212 = vector.broadcast %211 : f32 to vector<32x128xf32>
    %213 = arith.mulf %5, %212 : vector<32x128xf32>
    %c53 = arith.constant 53 : index
    %214 = memref.load %arg1[%c53] : memref<120xf32, #tpu.memory_space<smem>>
    %215 = vector.broadcast %214 : f32 to vector<32x128xf32>
    %216 = arith.mulf %8, %215 : vector<32x128xf32>
    %217 = arith.addf %213, %216 : vector<32x128xf32>
    %c54 = arith.constant 54 : index
    %218 = memref.load %arg1[%c54] : memref<120xf32, #tpu.memory_space<smem>>
    %219 = vector.broadcast %218 : f32 to vector<32x128xf32>
    %220 = arith.mulf %11, %219 : vector<32x128xf32>
    %c55 = arith.constant 55 : index
    %221 = memref.load %arg1[%c55] : memref<120xf32, #tpu.memory_space<smem>>
    %222 = vector.broadcast %221 : f32 to vector<32x128xf32>
    %223 = arith.addf %220, %222 : vector<32x128xf32>
    %224 = arith.addf %217, %223 : vector<32x128xf32>
    %225 = arith.minimumf %210, %224 : vector<32x128xf32>
    %c56 = arith.constant 56 : index
    %226 = memref.load %arg1[%c56] : memref<120xf32, #tpu.memory_space<smem>>
    %227 = vector.broadcast %226 : f32 to vector<32x128xf32>
    %228 = arith.mulf %5, %227 : vector<32x128xf32>
    %c57 = arith.constant 57 : index
    %229 = memref.load %arg1[%c57] : memref<120xf32, #tpu.memory_space<smem>>
    %230 = vector.broadcast %229 : f32 to vector<32x128xf32>
    %231 = arith.mulf %8, %230 : vector<32x128xf32>
    %232 = arith.addf %228, %231 : vector<32x128xf32>
    %c58 = arith.constant 58 : index
    %233 = memref.load %arg1[%c58] : memref<120xf32, #tpu.memory_space<smem>>
    %234 = vector.broadcast %233 : f32 to vector<32x128xf32>
    %235 = arith.mulf %11, %234 : vector<32x128xf32>
    %c59 = arith.constant 59 : index
    %236 = memref.load %arg1[%c59] : memref<120xf32, #tpu.memory_space<smem>>
    %237 = vector.broadcast %236 : f32 to vector<32x128xf32>
    %238 = arith.addf %235, %237 : vector<32x128xf32>
    %239 = arith.addf %232, %238 : vector<32x128xf32>
    %240 = arith.minimumf %225, %239 : vector<32x128xf32>
    %c60 = arith.constant 60 : index
    %241 = memref.load %arg1[%c60] : memref<120xf32, #tpu.memory_space<smem>>
    %242 = vector.broadcast %241 : f32 to vector<32x128xf32>
    %243 = arith.mulf %5, %242 : vector<32x128xf32>
    %c61 = arith.constant 61 : index
    %244 = memref.load %arg1[%c61] : memref<120xf32, #tpu.memory_space<smem>>
    %245 = vector.broadcast %244 : f32 to vector<32x128xf32>
    %246 = arith.mulf %8, %245 : vector<32x128xf32>
    %247 = arith.addf %243, %246 : vector<32x128xf32>
    %c62 = arith.constant 62 : index
    %248 = memref.load %arg1[%c62] : memref<120xf32, #tpu.memory_space<smem>>
    %249 = vector.broadcast %248 : f32 to vector<32x128xf32>
    %250 = arith.mulf %11, %249 : vector<32x128xf32>
    %c63 = arith.constant 63 : index
    %251 = memref.load %arg1[%c63] : memref<120xf32, #tpu.memory_space<smem>>
    %252 = vector.broadcast %251 : f32 to vector<32x128xf32>
    %253 = arith.addf %250, %252 : vector<32x128xf32>
    %254 = arith.addf %247, %253 : vector<32x128xf32>
    %255 = arith.minimumf %240, %254 : vector<32x128xf32>
    %c64 = arith.constant 64 : index
    %256 = memref.load %arg1[%c64] : memref<120xf32, #tpu.memory_space<smem>>
    %257 = vector.broadcast %256 : f32 to vector<32x128xf32>
    %258 = arith.mulf %5, %257 : vector<32x128xf32>
    %c65 = arith.constant 65 : index
    %259 = memref.load %arg1[%c65] : memref<120xf32, #tpu.memory_space<smem>>
    %260 = vector.broadcast %259 : f32 to vector<32x128xf32>
    %261 = arith.mulf %8, %260 : vector<32x128xf32>
    %262 = arith.addf %258, %261 : vector<32x128xf32>
    %c66 = arith.constant 66 : index
    %263 = memref.load %arg1[%c66] : memref<120xf32, #tpu.memory_space<smem>>
    %264 = vector.broadcast %263 : f32 to vector<32x128xf32>
    %265 = arith.mulf %11, %264 : vector<32x128xf32>
    %c67 = arith.constant 67 : index
    %266 = memref.load %arg1[%c67] : memref<120xf32, #tpu.memory_space<smem>>
    %267 = vector.broadcast %266 : f32 to vector<32x128xf32>
    %268 = arith.addf %265, %267 : vector<32x128xf32>
    %269 = arith.addf %262, %268 : vector<32x128xf32>
    %270 = arith.minimumf %255, %269 : vector<32x128xf32>
    %c68 = arith.constant 68 : index
    %271 = memref.load %arg1[%c68] : memref<120xf32, #tpu.memory_space<smem>>
    %272 = vector.broadcast %271 : f32 to vector<32x128xf32>
    %273 = arith.mulf %5, %272 : vector<32x128xf32>
    %c69 = arith.constant 69 : index
    %274 = memref.load %arg1[%c69] : memref<120xf32, #tpu.memory_space<smem>>
    %275 = vector.broadcast %274 : f32 to vector<32x128xf32>
    %276 = arith.mulf %8, %275 : vector<32x128xf32>
    %277 = arith.addf %273, %276 : vector<32x128xf32>
    %c70 = arith.constant 70 : index
    %278 = memref.load %arg1[%c70] : memref<120xf32, #tpu.memory_space<smem>>
    %279 = vector.broadcast %278 : f32 to vector<32x128xf32>
    %280 = arith.mulf %11, %279 : vector<32x128xf32>
    %c71 = arith.constant 71 : index
    %281 = memref.load %arg1[%c71] : memref<120xf32, #tpu.memory_space<smem>>
    %282 = vector.broadcast %281 : f32 to vector<32x128xf32>
    %283 = arith.addf %280, %282 : vector<32x128xf32>
    %284 = arith.addf %277, %283 : vector<32x128xf32>
    %285 = arith.minimumf %270, %284 : vector<32x128xf32>
    %c72 = arith.constant 72 : index
    %286 = memref.load %arg1[%c72] : memref<120xf32, #tpu.memory_space<smem>>
    %287 = vector.broadcast %286 : f32 to vector<32x128xf32>
    %288 = arith.mulf %5, %287 : vector<32x128xf32>
    %c73 = arith.constant 73 : index
    %289 = memref.load %arg1[%c73] : memref<120xf32, #tpu.memory_space<smem>>
    %290 = vector.broadcast %289 : f32 to vector<32x128xf32>
    %291 = arith.mulf %8, %290 : vector<32x128xf32>
    %292 = arith.addf %288, %291 : vector<32x128xf32>
    %c74 = arith.constant 74 : index
    %293 = memref.load %arg1[%c74] : memref<120xf32, #tpu.memory_space<smem>>
    %294 = vector.broadcast %293 : f32 to vector<32x128xf32>
    %295 = arith.mulf %11, %294 : vector<32x128xf32>
    %c75 = arith.constant 75 : index
    %296 = memref.load %arg1[%c75] : memref<120xf32, #tpu.memory_space<smem>>
    %297 = vector.broadcast %296 : f32 to vector<32x128xf32>
    %298 = arith.addf %295, %297 : vector<32x128xf32>
    %299 = arith.addf %292, %298 : vector<32x128xf32>
    %300 = arith.minimumf %285, %299 : vector<32x128xf32>
    %c76 = arith.constant 76 : index
    %301 = memref.load %arg1[%c76] : memref<120xf32, #tpu.memory_space<smem>>
    %302 = vector.broadcast %301 : f32 to vector<32x128xf32>
    %303 = arith.mulf %5, %302 : vector<32x128xf32>
    %c77 = arith.constant 77 : index
    %304 = memref.load %arg1[%c77] : memref<120xf32, #tpu.memory_space<smem>>
    %305 = vector.broadcast %304 : f32 to vector<32x128xf32>
    %306 = arith.mulf %8, %305 : vector<32x128xf32>
    %307 = arith.addf %303, %306 : vector<32x128xf32>
    %c78 = arith.constant 78 : index
    %308 = memref.load %arg1[%c78] : memref<120xf32, #tpu.memory_space<smem>>
    %309 = vector.broadcast %308 : f32 to vector<32x128xf32>
    %310 = arith.mulf %11, %309 : vector<32x128xf32>
    %c79 = arith.constant 79 : index
    %311 = memref.load %arg1[%c79] : memref<120xf32, #tpu.memory_space<smem>>
    %312 = vector.broadcast %311 : f32 to vector<32x128xf32>
    %313 = arith.addf %310, %312 : vector<32x128xf32>
    %314 = arith.addf %307, %313 : vector<32x128xf32>
    %315 = arith.minimumf %300, %314 : vector<32x128xf32>
    %c80 = arith.constant 80 : index
    %316 = memref.load %arg1[%c80] : memref<120xf32, #tpu.memory_space<smem>>
    %317 = vector.broadcast %316 : f32 to vector<32x128xf32>
    %318 = arith.mulf %5, %317 : vector<32x128xf32>
    %c81 = arith.constant 81 : index
    %319 = memref.load %arg1[%c81] : memref<120xf32, #tpu.memory_space<smem>>
    %320 = vector.broadcast %319 : f32 to vector<32x128xf32>
    %321 = arith.mulf %8, %320 : vector<32x128xf32>
    %322 = arith.addf %318, %321 : vector<32x128xf32>
    %c82 = arith.constant 82 : index
    %323 = memref.load %arg1[%c82] : memref<120xf32, #tpu.memory_space<smem>>
    %324 = vector.broadcast %323 : f32 to vector<32x128xf32>
    %325 = arith.mulf %11, %324 : vector<32x128xf32>
    %c83 = arith.constant 83 : index
    %326 = memref.load %arg1[%c83] : memref<120xf32, #tpu.memory_space<smem>>
    %327 = vector.broadcast %326 : f32 to vector<32x128xf32>
    %328 = arith.addf %325, %327 : vector<32x128xf32>
    %329 = arith.addf %322, %328 : vector<32x128xf32>
    %330 = arith.minimumf %315, %329 : vector<32x128xf32>
    %c84 = arith.constant 84 : index
    %331 = memref.load %arg1[%c84] : memref<120xf32, #tpu.memory_space<smem>>
    %332 = vector.broadcast %331 : f32 to vector<32x128xf32>
    %333 = arith.mulf %5, %332 : vector<32x128xf32>
    %c85 = arith.constant 85 : index
    %334 = memref.load %arg1[%c85] : memref<120xf32, #tpu.memory_space<smem>>
    %335 = vector.broadcast %334 : f32 to vector<32x128xf32>
    %336 = arith.mulf %8, %335 : vector<32x128xf32>
    %337 = arith.addf %333, %336 : vector<32x128xf32>
    %c86 = arith.constant 86 : index
    %338 = memref.load %arg1[%c86] : memref<120xf32, #tpu.memory_space<smem>>
    %339 = vector.broadcast %338 : f32 to vector<32x128xf32>
    %340 = arith.mulf %11, %339 : vector<32x128xf32>
    %c87 = arith.constant 87 : index
    %341 = memref.load %arg1[%c87] : memref<120xf32, #tpu.memory_space<smem>>
    %342 = vector.broadcast %341 : f32 to vector<32x128xf32>
    %343 = arith.addf %340, %342 : vector<32x128xf32>
    %344 = arith.addf %337, %343 : vector<32x128xf32>
    %345 = arith.minimumf %330, %344 : vector<32x128xf32>
    %c88 = arith.constant 88 : index
    %346 = memref.load %arg1[%c88] : memref<120xf32, #tpu.memory_space<smem>>
    %347 = vector.broadcast %346 : f32 to vector<32x128xf32>
    %348 = arith.mulf %5, %347 : vector<32x128xf32>
    %c89 = arith.constant 89 : index
    %349 = memref.load %arg1[%c89] : memref<120xf32, #tpu.memory_space<smem>>
    %350 = vector.broadcast %349 : f32 to vector<32x128xf32>
    %351 = arith.mulf %8, %350 : vector<32x128xf32>
    %352 = arith.addf %348, %351 : vector<32x128xf32>
    %c90 = arith.constant 90 : index
    %353 = memref.load %arg1[%c90] : memref<120xf32, #tpu.memory_space<smem>>
    %354 = vector.broadcast %353 : f32 to vector<32x128xf32>
    %355 = arith.mulf %11, %354 : vector<32x128xf32>
    %c91 = arith.constant 91 : index
    %356 = memref.load %arg1[%c91] : memref<120xf32, #tpu.memory_space<smem>>
    %357 = vector.broadcast %356 : f32 to vector<32x128xf32>
    %358 = arith.addf %355, %357 : vector<32x128xf32>
    %359 = arith.addf %352, %358 : vector<32x128xf32>
    %360 = arith.minimumf %345, %359 : vector<32x128xf32>
    %c92 = arith.constant 92 : index
    %361 = memref.load %arg1[%c92] : memref<120xf32, #tpu.memory_space<smem>>
    %362 = vector.broadcast %361 : f32 to vector<32x128xf32>
    %363 = arith.mulf %5, %362 : vector<32x128xf32>
    %c93 = arith.constant 93 : index
    %364 = memref.load %arg1[%c93] : memref<120xf32, #tpu.memory_space<smem>>
    %365 = vector.broadcast %364 : f32 to vector<32x128xf32>
    %366 = arith.mulf %8, %365 : vector<32x128xf32>
    %367 = arith.addf %363, %366 : vector<32x128xf32>
    %c94 = arith.constant 94 : index
    %368 = memref.load %arg1[%c94] : memref<120xf32, #tpu.memory_space<smem>>
    %369 = vector.broadcast %368 : f32 to vector<32x128xf32>
    %370 = arith.mulf %11, %369 : vector<32x128xf32>
    %c95 = arith.constant 95 : index
    %371 = memref.load %arg1[%c95] : memref<120xf32, #tpu.memory_space<smem>>
    %372 = vector.broadcast %371 : f32 to vector<32x128xf32>
    %373 = arith.addf %370, %372 : vector<32x128xf32>
    %374 = arith.addf %367, %373 : vector<32x128xf32>
    %375 = arith.minimumf %360, %374 : vector<32x128xf32>
    %c96 = arith.constant 96 : index
    %376 = memref.load %arg1[%c96] : memref<120xf32, #tpu.memory_space<smem>>
    %377 = vector.broadcast %376 : f32 to vector<32x128xf32>
    %378 = arith.mulf %5, %377 : vector<32x128xf32>
    %c97 = arith.constant 97 : index
    %379 = memref.load %arg1[%c97] : memref<120xf32, #tpu.memory_space<smem>>
    %380 = vector.broadcast %379 : f32 to vector<32x128xf32>
    %381 = arith.mulf %8, %380 : vector<32x128xf32>
    %382 = arith.addf %378, %381 : vector<32x128xf32>
    %c98 = arith.constant 98 : index
    %383 = memref.load %arg1[%c98] : memref<120xf32, #tpu.memory_space<smem>>
    %384 = vector.broadcast %383 : f32 to vector<32x128xf32>
    %385 = arith.mulf %11, %384 : vector<32x128xf32>
    %c99 = arith.constant 99 : index
    %386 = memref.load %arg1[%c99] : memref<120xf32, #tpu.memory_space<smem>>
    %387 = vector.broadcast %386 : f32 to vector<32x128xf32>
    %388 = arith.addf %385, %387 : vector<32x128xf32>
    %389 = arith.addf %382, %388 : vector<32x128xf32>
    %390 = arith.minimumf %375, %389 : vector<32x128xf32>
    %c100 = arith.constant 100 : index
    %391 = memref.load %arg1[%c100] : memref<120xf32, #tpu.memory_space<smem>>
    %392 = vector.broadcast %391 : f32 to vector<32x128xf32>
    %393 = arith.mulf %5, %392 : vector<32x128xf32>
    %c101 = arith.constant 101 : index
    %394 = memref.load %arg1[%c101] : memref<120xf32, #tpu.memory_space<smem>>
    %395 = vector.broadcast %394 : f32 to vector<32x128xf32>
    %396 = arith.mulf %8, %395 : vector<32x128xf32>
    %397 = arith.addf %393, %396 : vector<32x128xf32>
    %c102 = arith.constant 102 : index
    %398 = memref.load %arg1[%c102] : memref<120xf32, #tpu.memory_space<smem>>
    %399 = vector.broadcast %398 : f32 to vector<32x128xf32>
    %400 = arith.mulf %11, %399 : vector<32x128xf32>
    %c103 = arith.constant 103 : index
    %401 = memref.load %arg1[%c103] : memref<120xf32, #tpu.memory_space<smem>>
    %402 = vector.broadcast %401 : f32 to vector<32x128xf32>
    %403 = arith.addf %400, %402 : vector<32x128xf32>
    %404 = arith.addf %397, %403 : vector<32x128xf32>
    %405 = arith.minimumf %390, %404 : vector<32x128xf32>
    %c104 = arith.constant 104 : index
    %406 = memref.load %arg1[%c104] : memref<120xf32, #tpu.memory_space<smem>>
    %407 = vector.broadcast %406 : f32 to vector<32x128xf32>
    %408 = arith.mulf %5, %407 : vector<32x128xf32>
    %c105 = arith.constant 105 : index
    %409 = memref.load %arg1[%c105] : memref<120xf32, #tpu.memory_space<smem>>
    %410 = vector.broadcast %409 : f32 to vector<32x128xf32>
    %411 = arith.mulf %8, %410 : vector<32x128xf32>
    %412 = arith.addf %408, %411 : vector<32x128xf32>
    %c106 = arith.constant 106 : index
    %413 = memref.load %arg1[%c106] : memref<120xf32, #tpu.memory_space<smem>>
    %414 = vector.broadcast %413 : f32 to vector<32x128xf32>
    %415 = arith.mulf %11, %414 : vector<32x128xf32>
    %c107 = arith.constant 107 : index
    %416 = memref.load %arg1[%c107] : memref<120xf32, #tpu.memory_space<smem>>
    %417 = vector.broadcast %416 : f32 to vector<32x128xf32>
    %418 = arith.addf %415, %417 : vector<32x128xf32>
    %419 = arith.addf %412, %418 : vector<32x128xf32>
    %420 = arith.minimumf %405, %419 : vector<32x128xf32>
    %c108 = arith.constant 108 : index
    %421 = memref.load %arg1[%c108] : memref<120xf32, #tpu.memory_space<smem>>
    %422 = vector.broadcast %421 : f32 to vector<32x128xf32>
    %423 = arith.mulf %5, %422 : vector<32x128xf32>
    %c109 = arith.constant 109 : index
    %424 = memref.load %arg1[%c109] : memref<120xf32, #tpu.memory_space<smem>>
    %425 = vector.broadcast %424 : f32 to vector<32x128xf32>
    %426 = arith.mulf %8, %425 : vector<32x128xf32>
    %427 = arith.addf %423, %426 : vector<32x128xf32>
    %c110 = arith.constant 110 : index
    %428 = memref.load %arg1[%c110] : memref<120xf32, #tpu.memory_space<smem>>
    %429 = vector.broadcast %428 : f32 to vector<32x128xf32>
    %430 = arith.mulf %11, %429 : vector<32x128xf32>
    %c111 = arith.constant 111 : index
    %431 = memref.load %arg1[%c111] : memref<120xf32, #tpu.memory_space<smem>>
    %432 = vector.broadcast %431 : f32 to vector<32x128xf32>
    %433 = arith.addf %430, %432 : vector<32x128xf32>
    %434 = arith.addf %427, %433 : vector<32x128xf32>
    %435 = arith.minimumf %420, %434 : vector<32x128xf32>
    %c112 = arith.constant 112 : index
    %436 = memref.load %arg1[%c112] : memref<120xf32, #tpu.memory_space<smem>>
    %437 = vector.broadcast %436 : f32 to vector<32x128xf32>
    %438 = arith.mulf %5, %437 : vector<32x128xf32>
    %c113 = arith.constant 113 : index
    %439 = memref.load %arg1[%c113] : memref<120xf32, #tpu.memory_space<smem>>
    %440 = vector.broadcast %439 : f32 to vector<32x128xf32>
    %441 = arith.mulf %8, %440 : vector<32x128xf32>
    %442 = arith.addf %438, %441 : vector<32x128xf32>
    %c114 = arith.constant 114 : index
    %443 = memref.load %arg1[%c114] : memref<120xf32, #tpu.memory_space<smem>>
    %444 = vector.broadcast %443 : f32 to vector<32x128xf32>
    %445 = arith.mulf %11, %444 : vector<32x128xf32>
    %c115 = arith.constant 115 : index
    %446 = memref.load %arg1[%c115] : memref<120xf32, #tpu.memory_space<smem>>
    %447 = vector.broadcast %446 : f32 to vector<32x128xf32>
    %448 = arith.addf %445, %447 : vector<32x128xf32>
    %449 = arith.addf %442, %448 : vector<32x128xf32>
    %450 = arith.minimumf %435, %449 : vector<32x128xf32>
    %c116 = arith.constant 116 : index
    %451 = memref.load %arg1[%c116] : memref<120xf32, #tpu.memory_space<smem>>
    %452 = vector.broadcast %451 : f32 to vector<32x128xf32>
    %453 = arith.mulf %5, %452 : vector<32x128xf32>
    %c117 = arith.constant 117 : index
    %454 = memref.load %arg1[%c117] : memref<120xf32, #tpu.memory_space<smem>>
    %455 = vector.broadcast %454 : f32 to vector<32x128xf32>
    %456 = arith.mulf %8, %455 : vector<32x128xf32>
    %457 = arith.addf %453, %456 : vector<32x128xf32>
    %c118 = arith.constant 118 : index
    %458 = memref.load %arg1[%c118] : memref<120xf32, #tpu.memory_space<smem>>
    %459 = vector.broadcast %458 : f32 to vector<32x128xf32>
    %460 = arith.mulf %11, %459 : vector<32x128xf32>
    %c119 = arith.constant 119 : index
    %461 = memref.load %arg1[%c119] : memref<120xf32, #tpu.memory_space<smem>>
    %462 = vector.broadcast %461 : f32 to vector<32x128xf32>
    %463 = arith.addf %460, %462 : vector<32x128xf32>
    %464 = arith.addf %457, %463 : vector<32x128xf32>
    %465 = arith.minimumf %450, %464 : vector<32x128xf32>
    %466 = arith.addf %16, %465 : vector<32x128xf32>
    %cst_6 = arith.constant 0.000000e+00 : f32
    %467 = vector.broadcast %cst_6 : f32 to vector<32x128xf32>
    %468 = arith.maximumf %466, %467 : vector<32x128xf32>
    %469 = math.sqrt %468 : vector<32x128xf32>
    %470 = vector.extract_strided_slice %469 {offsets = [0, 0], sizes = [8, 128], strides = [1, 1]} : vector<32x128xf32> to vector<8x128xf32>
    %471 = vector.extract_strided_slice %469 {offsets = [8, 0], sizes = [8, 128], strides = [1, 1]} : vector<32x128xf32> to vector<8x128xf32>
    %472 = arith.addf %470, %471 : vector<8x128xf32>
    %473 = vector.extract_strided_slice %469 {offsets = [16, 0], sizes = [8, 128], strides = [1, 1]} : vector<32x128xf32> to vector<8x128xf32>
    %474 = arith.addf %472, %473 : vector<8x128xf32>
    %475 = vector.extract_strided_slice %469 {offsets = [24, 0], sizes = [8, 128], strides = [1, 1]} : vector<32x128xf32> to vector<8x128xf32>
    %476 = arith.addf %474, %475 : vector<8x128xf32>
    %477 = arith.addf %0, %476 : vector<8x128xf32>
    %c1_i32 = arith.constant 1 : i32
    %c0_7 = arith.constant 0 : index
    %c0_8 = arith.constant 0 : index
    %478 = vector.load %arg3[%c0_7, %c0_8] : memref<8x128xf32, #tpu.memory_space<vmem>>, vector<8x128xf32>
    tpu.vector_store %arg3[%c0_7, %c0_8], %477 {strides = array<i32>} : memref<8x128xf32, #tpu.memory_space<vmem>>, vector<8x128xf32>,
    return
  }
  func.func @transform_0(%arg0: i32) -> i32 {
    %c0_i32 = arith.constant 0 : i32
    %c0_i32_0 = arith.constant 0 : i32
    return %c0_i32 : i32
  }
  func.func @transform_1(%arg0: i32) -> (i32, i32, i32) {
    %c0_i32 = arith.constant 0 : i32
    %c0_i32_0 = arith.constant 0 : i32
    %c0_i32_1 = arith.constant 0 : i32
    return %c0_i32, %arg0, %c0_i32_0 : i32, i32, i32
  }
  func.func @transform_2(%arg0: i32) -> (i32, i32) {
    %c0_i32 = arith.constant 0 : i32
    %c0_i32_0 = arith.constant 0 : i32
    return %arg0, %c0_i32 : i32, i32
  }
}

</mosaic_0001>

<llo_original>
// kernel: nps_score.1
$region0: #{nps_score.1}
  #allocation0 [shape = 'u32[]', space=smem, size = 0x4, offset = 0x4, fixed_abs, tag = 'smem constant byte address 0x4 - core index']
  #allocation1 [shape = 'u32[144,128]{1,0:T(1,128)}', space=vmem, size = 0x12000, scoped, tag = 'internal scratch']
  %s0 = inlined_call_operand.vmem [shape: f32[120], index: 0, kind: input, shape index: {}]
  %s1 = inlined_call_operand.vmem [shape: f32[3,32,128], index: 1, kind: input, shape index: {}]
  %s2 = inlined_call_operand.vmem [shape: f32[8,128], index: 2, kind: output, shape index: {}]
  %s3 = sld [smem:[#allocation0]]
  $region22: #{nps_score.1} parent=0
    _
  %s5 = ssub.s32 1, %s3
  %s6 = scalar_select 0, %s5, %s3
  $region1: #{nps_score.1} parent=0
    #allocation2 [shape = 'u8[512]{0}', space=smem, size = 0x200, scoped, tag = 'input window, operand 0, single buffered']
    #allocation3 [shape = 's32[1]{0}', space=sflag, size = 0x4, scoped, tag = 'scoped memory for nps_score.1']
    %7 = vsyncpa [#allocation3], 0
    // Predicated region
    $region2: #{nps_score.1} parent=1 // pred_check
      _
    $region3: #{nps_score.1} parent=1 // pred_check_branch
      %9 = sbr.rel (0) target = $region5
    $region4: #{nps_score.1} parent=1 // pred_region
      %s11 = ssub.s32 16, 16
      %12 = vsyncadd [#allocation3], %s11
      %s14 = sshll.u32 %s0, 4
      %s15 = int_to_ptr.vmem [resolvable:$true] %s14
      %17 = dma.vmem_to_smem %s15, 16, [#allocation2], [#allocation3]
    $region5: #{nps_score.1} parent=1 // pred_fallthru
      _
    // Predicated region
    $region6: #{nps_score.1} parent=1 // pred_check
      _
    $region7: #{nps_score.1} parent=1 // pred_check_branch
      %19 = sbr.rel (0) target = $region9
    $region8: #{nps_score.1} parent=1 // pred_region
      _
    $region9: #{nps_score.1} parent=1 // pred_fallthru
      _
    // Predicated region
    $region10: #{nps_score.1} parent=1 // pred_check
      _
    $region11: #{nps_score.1} parent=1 // pred_check_branch
      %21 = sbr.rel (0) target = $region13
    $region12: #{nps_score.1} parent=1 // pred_region
      %22 = dma.done [#allocation3], 16
    $region13: #{nps_score.1} parent=1 // pred_fallthru
      _
    %23 = sfence
    %v24 = vld [vmem:[%s1] sm:$0xff]
    %v25 = vld [vmem:[%s1 + $0x8] sm:$0xff]
    %v26 = vld [vmem:[%s1 + $0x10] sm:$0xff]
    %v27 = vld [vmem:[%s1 + $0x18] sm:$0xff]
    %s28 = sadd.s32 0, 32
    %s29 = scalar_lea.vmem %s1, %s28
    %v30 = vld [vmem:[%s29] sm:$0xff]
    %v31 = vld [vmem:[%s29 + $0x8] sm:$0xff]
    %v32 = vld [vmem:[%s29 + $0x10] sm:$0xff]
    %v33 = vld [vmem:[%s29 + $0x18] sm:$0xff]
    %s34 = sadd.s32 0, 64
    %s35 = scalar_lea.vmem %s1, %s34
    %v36 = vld [vmem:[%s35] sm:$0xff]
    %v37 = vld [vmem:[%s35 + $0x8] sm:$0xff]
    %v38 = vld [vmem:[%s35 + $0x10] sm:$0xff]
    %v39 = vld [vmem:[%s35 + $0x18] sm:$0xff]
    %v40 = vmul.f32 %v24, %v24
    %v41 = vmul.f32 %v25, %v25
    %v42 = vmul.f32 %v26, %v26
    %v43 = vmul.f32 %v27, %v27
    %v44 = vmul.f32 %v30, %v30
    %v45 = vmul.f32 %v31, %v31
    %v46 = vmul.f32 %v32, %v32
    %v47 = vmul.f32 %v33, %v33
    %v48 = vadd.f32 %v40, %v44
    %v49 = vadd.f32 %v41, %v45
    %v50 = vadd.f32 %v42, %v46
    %v51 = vadd.f32 %v43, %v47
    %v52 = vmul.f32 %v36, %v36
    %v53 = vmul.f32 %v37, %v37
    %v54 = vmul.f32 %v38, %v38
    %v55 = vmul.f32 %v39, %v39
    %v56 = vadd.f32 %v48, %v52
    %v57 = vadd.f32 %v49, %v53
    %v58 = vadd.f32 %v50, %v54
    %v59 = vadd.f32 %v51, %v55
    %s60 = sld [smem:[#allocation2]]
    %v61 = vstv %s60
    %v62 = vmul.f32 %v24, %v61
    %v63 = vmul.f32 %v25, %v61
    %v64 = vmul.f32 %v26, %v61
    %v65 = vmul.f32 %v27, %v61
    %s66 = sld [smem:[#allocation2 + $0x1]]
    %v67 = vstv %s66
    %v68 = vmul.f32 %v30, %v67
    %v69 = vmul.f32 %v31, %v67
    %v70 = vmul.f32 %v32, %v67
    %v71 = vmul.f32 %v33, %v67
    %v72 = vadd.f32 %v62, %v68
    %v73 = vadd.f32 %v63, %v69
    %v74 = vadd.f32 %v64, %v70
    %v75 = vadd.f32 %v65, %v71
    %s76 = sld [smem:[#allocation2 + $0x2]]
    %v77 = vstv %s76
    %v78 = vmul.f32 %v36, %v77
    %v79 = vmul.f32 %v37, %v77
    %v80 = vmul.f32 %v38, %v77
    %v81 = vmul.f32 %v39, %v77
    %s82 = sld [smem:[#allocation2 + $0x3]]
    %v83 = vstv %s82
    %v84 = vadd.f32 %v78, %v83
    %v85 = vadd.f32 %v79, %v83
    %v86 = vadd.f32 %v80, %v83
    %v87 = vadd.f32 %v81, %v83
    %v88 = vadd.f32 %v72, %v84
    %v89 = vadd.f32 %v73, %v85
    %v90 = vadd.f32 %v74, %v86
    %v91 = vadd.f32 %v75, %v87
    %s92 = sld [smem:[#allocation2 + $0x4]]
    %v93 = vstv %s92
    %v94 = vmul.f32 %v24, %v93
    %v95 = vmul.f32 %v25, %v93
    %v96 = vmul.f32 %v26, %v93
    %v97 = vmul.f32 %v27, %v93
    %s98 = sld [smem:[#allocation2 + $0x5]]
    %v99 = vstv %s98
    %v100 = vmul.f32 %v30, %v99
    %v101 = vmul.f32 %v31, %v99
    %v102 = vmul.f32 %v32, %v99
    %v103 = vmul.f32 %v33, %v99
    %v104 = vadd.f32 %v94, %v100
    %v105 = vadd.f32 %v95, %v101
    %v106 = vadd.f32 %v96, %v102
    %v107 = vadd.f32 %v97, %v103
    %s108 = sld [smem:[#allocation2 + $0x6]]
    %v109 = vstv %s108
    %v110 = vmul.f32 %v36, %v109
    %v111 = vmul.f32 %v37, %v109
    %v112 = vmul.f32 %v38, %v109
    %v113 = vmul.f32 %v39, %v109
    %s114 = sld [smem:[#allocation2 + $0x7]]
    %v115 = vstv %s114
    %v116 = vadd.f32 %v110, %v115
    %v117 = vadd.f32 %v111, %v115
    %v118 = vadd.f32 %v112, %v115
    %v119 = vadd.f32 %v113, %v115
    %v120 = vadd.f32 %v104, %v116
    %v121 = vadd.f32 %v105, %v117
    %v122 = vadd.f32 %v106, %v118
    %v123 = vadd.f32 %v107, %v119
    %v124 = vmin.f32 %v88, %v120
    %v125 = vmin.f32 %v89, %v121
    %v126 = vmin.f32 %v90, %v122
    %v127 = vmin.f32 %v91, %v123
    %s128 = sld [smem:[#allocation2 + $0x8]]
    %v129 = vstv %s128
    %v130 = vmul.f32 %v24, %v129
    %v131 = vmul.f32 %v25, %v129
    %v132 = vmul.f32 %v26, %v129
    %v133 = vmul.f32 %v27, %v129
    %s134 = sld [smem:[#allocation2 + $0x9]]
    %v135 = vstv %s134
    %v136 = vmul.f32 %v30, %v135
    %v137 = vmul.f32 %v31, %v135
    %v138 = vmul.f32 %v32, %v135
    %v139 = vmul.f32 %v33, %v135
    %v140 = vadd.f32 %v130, %v136
    %v141 = vadd.f32 %v131, %v137
    %v142 = vadd.f32 %v132, %v138
    %v143 = vadd.f32 %v133, %v139
    %s144 = sld [smem:[#allocation2 + $0xa]]
    %v145 = vstv %s144
    %v146 = vmul.f32 %v36, %v145
    %v147 = vmul.f32 %v37, %v145
    %v148 = vmul.f32 %v38, %v145
    %v149 = vmul.f32 %v39, %v145
    %s150 = sld [smem:[#allocation2 + $0xb]]
    %v151 = vstv %s150
    %v152 = vadd.f32 %v146, %v151
    %v153 = vadd.f32 %v147, %v151
    %v154 = vadd.f32 %v148, %v151
    %v155 = vadd.f32 %v149, %v151
    %v156 = vadd.f32 %v140, %v152
    %v157 = vadd.f32 %v141, %v153
    %v158 = vadd.f32 %v142, %v154
    %v159 = vadd.f32 %v143, %v155
    %v160 = vmin.f32 %v124, %v156
    %v161 = vmin.f32 %v125, %v157
    %v162 = vmin.f32 %v126, %v158
    %v163 = vmin.f32 %v127, %v159
    %s164 = sld [smem:[#allocation2 + $0xc]]
    %v165 = vstv %s164
    %v166 = vmul.f32 %v24, %v165
    %v167 = vmul.f32 %v25, %v165
    %v168 = vmul.f32 %v26, %v165
    %v169 = vmul.f32 %v27, %v165
    %s170 = sld [smem:[#allocation2 + $0xd]]
    %v171 = vstv %s170
    %v172 = vmul.f32 %v30, %v171
    %v173 = vmul.f32 %v31, %v171
    %v174 = vmul.f32 %v32, %v171
    %v175 = vmul.f32 %v33, %v171
    %v176 = vadd.f32 %v166, %v172
    %v177 = vadd.f32 %v167, %v173
    %v178 = vadd.f32 %v168, %v174
    %v179 = vadd.f32 %v169, %v175
    %s180 = sld [smem:[#allocation2 + $0xe]]
    %v181 = vstv %s180
    %v182 = vmul.f32 %v36, %v181
    %v183 = vmul.f32 %v37, %v181
    %v184 = vmul.f32 %v38, %v181
    %v185 = vmul.f32 %v39, %v181
    %s186 = sld [smem:[#allocation2 + $0xf]]
    %v187 = vstv %s186
    %v188 = vadd.f32 %v182, %v187
    %v189 = vadd.f32 %v183, %v187
    %v190 = vadd.f32 %v184, %v187
    %v191 = vadd.f32 %v185, %v187
    %v192 = vadd.f32 %v176, %v188
    %v193 = vadd.f32 %v177, %v189
    %v194 = vadd.f32 %v178, %v190
    %v195 = vadd.f32 %v179, %v191
    %v196 = vmin.f32 %v160, %v192
    %v197 = vmin.f32 %v161, %v193
    %v198 = vmin.f32 %v162, %v194
    %v199 = vmin.f32 %v163, %v195
    %s200 = sld [smem:[#allocation2 + $0x10]]
    %v201 = vstv %s200
    %v202 = vmul.f32 %v24, %v201
    %v203 = vmul.f32 %v25, %v201
    %v204 = vmul.f32 %v26, %v201
    %v205 = vmul.f32 %v27, %v201
    %s206 = sld [smem:[#allocation2 + $0x11]]
    %v207 = vstv %s206
    %v208 = vmul.f32 %v30, %v207
    %v209 = vmul.f32 %v31, %v207
    %v210 = vmul.f32 %v32, %v207
    %v211 = vmul.f32 %v33, %v207
    %v212 = vadd.f32 %v202, %v208
    %v213 = vadd.f32 %v203, %v209
    %v214 = vadd.f32 %v204, %v210
    %v215 = vadd.f32 %v205, %v211
    %s216 = sld [smem:[#allocation2 + $0x12]]
    %v217 = vstv %s216
    %v218 = vmul.f32 %v36, %v217
    %v219 = vmul.f32 %v37, %v217
    %v220 = vmul.f32 %v38, %v217
    %v221 = vmul.f32 %v39, %v217
    %s222 = sld [smem:[#allocation2 + $0x13]]
    %v223 = vstv %s222
    %v224 = vadd.f32 %v218, %v223
    %v225 = vadd.f32 %v219, %v223
    %v226 = vadd.f32 %v220, %v223
    %v227 = vadd.f32 %v221, %v223
    %v228 = vadd.f32 %v212, %v224
    %v229 = vadd.f32 %v213, %v225
    %v230 = vadd.f32 %v214, %v226
    %v231 = vadd.f32 %v215, %v227
    %v232 = vmin.f32 %v196, %v228
    %v233 = vmin.f32 %v197, %v229
    %v234 = vmin.f32 %v198, %v230
    %v235 = vmin.f32 %v199, %v231
    %s236 = sld [smem:[#allocation2 + $0x14]]
    %v237 = vstv %s236
    %v238 = vmul.f32 %v24, %v237
    %v239 = vmul.f32 %v25, %v237
    %v240 = vmul.f32 %v26, %v237
    %v241 = vmul.f32 %v27, %v237
    %s242 = sld [smem:[#allocation2 + $0x15]]
    %v243 = vstv %s242
    %v244 = vmul.f32 %v30, %v243
    %v245 = vmul.f32 %v31, %v243
    %v246 = vmul.f32 %v32, %v243
    %v247 = vmul.f32 %v33, %v243
    %v248 = vadd.f32 %v238, %v244
    %v249 = vadd.f32 %v239, %v245
    %v250 = vadd.f32 %v240, %v246
    %v251 = vadd.f32 %v241, %v247
    %s252 = sld [smem:[#allocation2 + $0x16]]
    %v253 = vstv %s252
    %v254 = vmul.f32 %v36, %v253
    %v255 = vmul.f32 %v37, %v253
    %v256 = vmul.f32 %v38, %v253
    %v257 = vmul.f32 %v39, %v253
    %s258 = sld [smem:[#allocation2 + $0x17]]
    %v259 = vstv %s258
    %v260 = vadd.f32 %v254, %v259
    %v261 = vadd.f32 %v255, %v259
    %v262 = vadd.f32 %v256, %v259
    %v263 = vadd.f32 %v257, %v259
    %v264 = vadd.f32 %v248, %v260
    %v265 = vadd.f32 %v249, %v261
    %v266 = vadd.f32 %v250, %v262
    %v267 = vadd.f32 %v251, %v263
    %v268 = vmin.f32 %v232, %v264
    %v269 = vmin.f32 %v233, %v265
    %v270 = vmin.f32 %v234, %v266
    %v271 = vmin.f32 %v235, %v267
    %s272 = sld [smem:[#allocation2 + $0x18]]
    %v273 = vstv %s272
    %v274 = vmul.f32 %v24, %v273
    %v275 = vmul.f32 %v25, %v273
    %v276 = vmul.f32 %v26, %v273
    %v277 = vmul.f32 %v27, %v273
    %s278 = sld [smem:[#allocation2 + $0x19]]
    %v279 = vstv %s278
    %v280 = vmul.f32 %v30, %v279
    %v281 = vmul.f32 %v31, %v279
    %v282 = vmul.f32 %v32, %v279
    %v283 = vmul.f32 %v33, %v279
    %v284 = vadd.f32 %v274, %v280
    %v285 = vadd.f32 %v275, %v281
    %v286 = vadd.f32 %v276, %v282
    %v287 = vadd.f32 %v277, %v283
    %s288 = sld [smem:[#allocation2 + $0x1a]]
    %v289 = vstv %s288
    %v290 = vmul.f32 %v36, %v289
    %v291 = vmul.f32 %v37, %v289
    %v292 = vmul.f32 %v38, %v289
    %v293 = vmul.f32 %v39, %v289
    %s294 = sld [smem:[#allocation2 + $0x1b]]
    %v295 = vstv %s294
    %v296 = vadd.f32 %v290, %v295
    %v297 = vadd.f32 %v291, %v295
    %v298 = vadd.f32 %v292, %v295
    %v299 = vadd.f32 %v293, %v295
    %v300 = vadd.f32 %v284, %v296
    %v301 = vadd.f32 %v285, %v297
    %v302 = vadd.f32 %v286, %v298
    %v303 = vadd.f32 %v287, %v299
    %v304 = vmin.f32 %v268, %v300
    %v305 = vmin.f32 %v269, %v301
    %v306 = vmin.f32 %v270, %v302
    %v307 = vmin.f32 %v271, %v303
    %s308 = sld [smem:[#allocation2 + $0x1c]]
    %v309 = vstv %s308
    %v310 = vmul.f32 %v24, %v309
    %v311 = vmul.f32 %v25, %v309
    %v312 = vmul.f32 %v26, %v309
    %v313 = vmul.f32 %v27, %v309
    %s314 = sld [smem:[#allocation2 + $0x1d]]
    %v315 = vstv %s314
    %v316 = vmul.f32 %v30, %v315
    %v317 = vmul.f32 %v31, %v315
    %v318 = vmul.f32 %v32, %v315
    %v319 = vmul.f32 %v33, %v315
    %v320 = vadd.f32 %v310, %v316
    %v321 = vadd.f32 %v311, %v317
    %v322 = vadd.f32 %v312, %v318
    %v323 = vadd.f32 %v313, %v319
    %s324 = sld [smem:[#allocation2 + $0x1e]]
    %v325 = vstv %s324
    %v326 = vmul.f32 %v36, %v325
    %v327 = vmul.f32 %v37, %v325
    %v328 = vmul.f32 %v38, %v325
    %v329 = vmul.f32 %v39, %v325
    %s330 = sld [smem:[#allocation2 + $0x1f]]
    %v331 = vstv %s330
    %v332 = vadd.f32 %v326, %v331
    %v333 = vadd.f32 %v327, %v331
    %v334 = vadd.f32 %v328, %v331
    %v335 = vadd.f32 %v329, %v331
    %v336 = vadd.f32 %v320, %v332
    %v337 = vadd.f32 %v321, %v333
    %v338 = vadd.f32 %v322, %v334
    %v339 = vadd.f32 %v323, %v335
    %v340 = vmin.f32 %v304, %v336
    %v341 = vmin.f32 %v305, %v337
    %v342 = vmin.f32 %v306, %v338
    %v343 = vmin.f32 %v307, %v339
    %s344 = sld [smem:[#allocation2 + $0x20]]
    %v345 = vstv %s344
    %v346 = vmul.f32 %v24, %v345
    %v347 = vmul.f32 %v25, %v345
    %v348 = vmul.f32 %v26, %v345
    %v349 = vmul.f32 %v27, %v345
    %s350 = sld [smem:[#allocation2 + $0x21]]
    %v351 = vstv %s350
    %v352 = vmul.f32 %v30, %v351
    %v353 = vmul.f32 %v31, %v351
    %v354 = vmul.f32 %v32, %v351
    %v355 = vmul.f32 %v33, %v351
    %v356 = vadd.f32 %v346, %v352
    %v357 = vadd.f32 %v347, %v353
    %v358 = vadd.f32 %v348, %v354
    %v359 = vadd.f32 %v349, %v355
    %s360 = sld [smem:[#allocation2 + $0x22]]
    %v361 = vstv %s360
    %v362 = vmul.f32 %v36, %v361
    %v363 = vmul.f32 %v37, %v361
    %v364 = vmul.f32 %v38, %v361
    %v365 = vmul.f32 %v39, %v361
    %s366 = sld [smem:[#allocation2 + $0x23]]
    %v367 = vstv %s366
    %v368 = vadd.f32 %v362, %v367
    %v369 = vadd.f32 %v363, %v367
    %v370 = vadd.f32 %v364, %v367
    %v371 = vadd.f32 %v365, %v367
    %v372 = vadd.f32 %v356, %v368
    %v373 = vadd.f32 %v357, %v369
    %v374 = vadd.f32 %v358, %v370
    %v375 = vadd.f32 %v359, %v371
    %v376 = vmin.f32 %v340, %v372
    %v377 = vmin.f32 %v341, %v373
    %v378 = vmin.f32 %v342, %v374
    %v379 = vmin.f32 %v343, %v375
    %s380 = sld [smem:[#allocation2 + $0x24]]
    %v381 = vstv %s380
    %v382 = vmul.f32 %v24, %v381
    %v383 = vmul.f32 %v25, %v381
    %v384 = vmul.f32 %v26, %v381
    %v385 = vmul.f32 %v27, %v381
    %s386 = sld [smem:[#allocation2 + $0x25]]
    %v387 = vstv %s386
    %v388 = vmul.f32 %v30, %v387
    %v389 = vmul.f32 %v31, %v387
    %v390 = vmul.f32 %v32, %v387
    %v391 = vmul.f32 %v33, %v387
    %v392 = vadd.f32 %v382, %v388
    %v393 = vadd.f32 %v383, %v389
    %v394 = vadd.f32 %v384, %v390
    %v395 = vadd.f32 %v385, %v391
    %s396 = sld [smem:[#allocation2 + $0x26]]
    %v397 = vstv %s396
    %v398 = vmul.f32 %v36, %v397
    %v399 = vmul.f32 %v37, %v397
    %v400 = vmul.f32 %v38, %v397
    %v401 = vmul.f32 %v39, %v397
    %s402 = sld [smem:[#allocation2 + $0x27]]
    %v403 = vstv %s402
    %v404 = vadd.f32 %v398, %v403
    %v405 = vadd.f32 %v399, %v403
    %v406 = vadd.f32 %v400, %v403
    %v407 = vadd.f32 %v401, %v403
    %v408 = vadd.f32 %v392, %v404
    %v409 = vadd.f32 %v393, %v405
    %v410 = vadd.f32 %v394, %v406
    %v411 = vadd.f32 %v395, %v407
    %v412 = vmin.f32 %v376, %v408
    %v413 = vmin.f32 %v377, %v409
    %v414 = vmin.f32 %v378, %v410
    %v415 = vmin.f32 %v379, %v411
    %s416 = sld [smem:[#allocation2 + $0x28]]
    %v417 = vstv %s416
    %v418 = vmul.f32 %v24, %v417
    %v419 = vmul.f32 %v25, %v417
    %v420 = vmul.f32 %v26, %v417
    %v421 = vmul.f32 %v27, %v417
    %s422 = sld [smem:[#allocation2 + $0x29]]
    %v423 = vstv %s422
    %v424 = vmul.f32 %v30, %v423
    %v425 = vmul.f32 %v31, %v423
    %v426 = vmul.f32 %v32, %v423
    %v427 = vmul.f32 %v33, %v423
    %v428 = vadd.f32 %v418, %v424
    %v429 = vadd.f32 %v419, %v425
    %v430 = vadd.f32 %v420, %v426
    %v431 = vadd.f32 %v421, %v427
    %s432 = sld [smem:[#allocation2 + $0x2a]]
    %v433 = vstv %s432
    %v434 = vmul.f32 %v36, %v433
    %v435 = vmul.f32 %v37, %v433
    %v436 = vmul.f32 %v38, %v433
    %v437 = vmul.f32 %v39, %v433
    %s438 = sld [smem:[#allocation2 + $0x2b]]
    %v439 = vstv %s438
    %v440 = vadd.f32 %v434, %v439
    %v441 = vadd.f32 %v435, %v439
    %v442 = vadd.f32 %v436, %v439
    %v443 = vadd.f32 %v437, %v439
    %v444 = vadd.f32 %v428, %v440
    %v445 = vadd.f32 %v429, %v441
    %v446 = vadd.f32 %v430, %v442
    %v447 = vadd.f32 %v431, %v443
    %v448 = vmin.f32 %v412, %v444
    %v449 = vmin.f32 %v413, %v445
    %v450 = vmin.f32 %v414, %v446
    %v451 = vmin.f32 %v415, %v447
    %s452 = sld [smem:[#allocation2 + $0x2c]]
    %v453 = vstv %s452
    %v454 = vmul.f32 %v24, %v453
    %v455 = vmul.f32 %v25, %v453
    %v456 = vmul.f32 %v26, %v453
    %v457 = vmul.f32 %v27, %v453
    %s458 = sld [smem:[#allocation2 + $0x2d]]
    %v459 = vstv %s458
    %v460 = vmul.f32 %v30, %v459
    %v461 = vmul.f32 %v31, %v459
    %v462 = vmul.f32 %v32, %v459
    %v463 = vmul.f32 %v33, %v459
    %v464 = vadd.f32 %v454, %v460
    %v465 = vadd.f32 %v455, %v461
    %v466 = vadd.f32 %v456, %v462
    %v467 = vadd.f32 %v457, %v463
    %s468 = sld [smem:[#allocation2 + $0x2e]]
    %v469 = vstv %s468
    %v470 = vmul.f32 %v36, %v469
    %v471 = vmul.f32 %v37, %v469
    %v472 = vmul.f32 %v38, %v469
    %v473 = vmul.f32 %v39, %v469
    %s474 = sld [smem:[#allocation2 + $0x2f]]
    %v475 = vstv %s474
    %v476 = vadd.f32 %v470, %v475
    %v477 = vadd.f32 %v471, %v475
    %v478 = vadd.f32 %v472, %v475
    %v479 = vadd.f32 %v473, %v475
    %v480 = vadd.f32 %v464, %v476
    %v481 = vadd.f32 %v465, %v477
    %v482 = vadd.f32 %v466, %v478
    %v483 = vadd.f32 %v467, %v479
    %v484 = vmin.f32 %v448, %v480
    %v485 = vmin.f32 %v449, %v481
    %v486 = vmin.f32 %v450, %v482
    %v487 = vmin.f32 %v451, %v483
    %s488 = sld [smem:[#allocation2 + $0x30]]
    %v489 = vstv %s488
    %v490 = vmul.f32 %v24, %v489
    %v491 = vmul.f32 %v25, %v489
    %v492 = vmul.f32 %v26, %v489
    %v493 = vmul.f32 %v27, %v489
    %s494 = sld [smem:[#allocation2 + $0x31]]
    %v495 = vstv %s494
    %v496 = vmul.f32 %v30, %v495
    %v497 = vmul.f32 %v31, %v495
    %v498 = vmul.f32 %v32, %v495
    %v499 = vmul.f32 %v33, %v495
    %v500 = vadd.f32 %v490, %v496
    %v501 = vadd.f32 %v491, %v497
    %v502 = vadd.f32 %v492, %v498
    %v503 = vadd.f32 %v493, %v499
    %s504 = sld [smem:[#allocation2 + $0x32]]
    %v505 = vstv %s504
    %v506 = vmul.f32 %v36, %v505
    %v507 = vmul.f32 %v37, %v505
    %v508 = vmul.f32 %v38, %v505
    %v509 = vmul.f32 %v39, %v505
    %s510 = sld [smem:[#allocation2 + $0x33]]
    %v511 = vstv %s510
    %v512 = vadd.f32 %v506, %v511
    %v513 = vadd.f32 %v507, %v511
    %v514 = vadd.f32 %v508, %v511
    %v515 = vadd.f32 %v509, %v511
    %v516 = vadd.f32 %v500, %v512
    %v517 = vadd.f32 %v501, %v513
    %v518 = vadd.f32 %v502, %v514
    %v519 = vadd.f32 %v503, %v515
    %v520 = vmin.f32 %v484, %v516
    %v521 = vmin.f32 %v485, %v517
    %v522 = vmin.f32 %v486, %v518
    %v523 = vmin.f32 %v487, %v519
    %s524 = sld [smem:[#allocation2 + $0x34]]
    %v525 = vstv %s524
    %v526 = vmul.f32 %v24, %v525
    %v527 = vmul.f32 %v25, %v525
    %v528 = vmul.f32 %v26, %v525
    %v529 = vmul.f32 %v27, %v525
    %s530 = sld [smem:[#allocation2 + $0x35]]
    %v531 = vstv %s530
    %v532 = vmul.f32 %v30, %v531
    %v533 = vmul.f32 %v31, %v531
    %v534 = vmul.f32 %v32, %v531
    %v535 = vmul.f32 %v33, %v531
    %v536 = vadd.f32 %v526, %v532
    %v537 = vadd.f32 %v527, %v533
    %v538 = vadd.f32 %v528, %v534
    %v539 = vadd.f32 %v529, %v535
    %s540 = sld [smem:[#allocation2 + $0x36]]
    %v541 = vstv %s540
    %v542 = vmul.f32 %v36, %v541
    %v543 = vmul.f32 %v37, %v541
    %v544 = vmul.f32 %v38, %v541
    %v545 = vmul.f32 %v39, %v541
    %s546 = sld [smem:[#allocation2 + $0x37]]
    %v547 = vstv %s546
    %v548 = vadd.f32 %v542, %v547
    %v549 = vadd.f32 %v543, %v547
    %v550 = vadd.f32 %v544, %v547
    %v551 = vadd.f32 %v545, %v547
    %v552 = vadd.f32 %v536, %v548
    %v553 = vadd.f32 %v537, %v549
    %v554 = vadd.f32 %v538, %v550
    %v555 = vadd.f32 %v539, %v551
    %v556 = vmin.f32 %v520, %v552
    %v557 = vmin.f32 %v521, %v553
    %v558 = vmin.f32 %v522, %v554
    %v559 = vmin.f32 %v523, %v555
    %s560 = sld [smem:[#allocation2 + $0x38]]
    %v561 = vstv %s560
    %v562 = vmul.f32 %v24, %v561
    %v563 = vmul.f32 %v25, %v561
    %v564 = vmul.f32 %v26, %v561
    %v565 = vmul.f32 %v27, %v561
    %s566 = sld [smem:[#allocation2 + $0x39]]
    %v567 = vstv %s566
    %v568 = vmul.f32 %v30, %v567
    %v569 = vmul.f32 %v31, %v567
    %v570 = vmul.f32 %v32, %v567
    %v571 = vmul.f32 %v33, %v567
    %v572 = vadd.f32 %v562, %v568
    %v573 = vadd.f32 %v563, %v569
    %v574 = vadd.f32 %v564, %v570
    %v575 = vadd.f32 %v565, %v571
    %s576 = sld [smem:[#allocation2 + $0x3a]]
    %v577 = vstv %s576
    %v578 = vmul.f32 %v36, %v577
    %v579 = vmul.f32 %v37, %v577
    %v580 = vmul.f32 %v38, %v577
    %v581 = vmul.f32 %v39, %v577
    %s582 = sld [smem:[#allocation2 + $0x3b]]
    %v583 = vstv %s582
    %v584 = vadd.f32 %v578, %v583
    %v585 = vadd.f32 %v579, %v583
    %v586 = vadd.f32 %v580, %v583
    %v587 = vadd.f32 %v581, %v583
    %v588 = vadd.f32 %v572, %v584
    %v589 = vadd.f32 %v573, %v585
    %v590 = vadd.f32 %v574, %v586
    %v591 = vadd.f32 %v575, %v587
    %v592 = vmin.f32 %v556, %v588
    %v593 = vmin.f32 %v557, %v589
    %v594 = vmin.f32 %v558, %v590
    %v595 = vmin.f32 %v559, %v591
    %s596 = sld [smem:[#allocation2 + $0x3c]]
    %v597 = vstv %s596
    %v598 = vmul.f32 %v24, %v597
    %v599 = vmul.f32 %v25, %v597
    %v600 = vmul.f32 %v26, %v597
    %v601 = vmul.f32 %v27, %v597
    %s602 = sld [smem:[#allocation2 + $0x3d]]
    %v603 = vstv %s602
    %v604 = vmul.f32 %v30, %v603
    %v605 = vmul.f32 %v31, %v603
    %v606 = vmul.f32 %v32, %v603
    %v607 = vmul.f32 %v33, %v603
    %v608 = vadd.f32 %v598, %v604
    %v609 = vadd.f32 %v599, %v605
    %v610 = vadd.f32 %v600, %v606
    %v611 = vadd.f32 %v601, %v607
    %s612 = sld [smem:[#allocation2 + $0x3e]]
    %v613 = vstv %s612
    %v614 = vmul.f32 %v36, %v613
    %v615 = vmul.f32 %v37, %v613
    %v616 = vmul.f32 %v38, %v613
    %v617 = vmul.f32 %v39, %v613
    %s618 = sld [smem:[#allocation2 + $0x3f]]
    %v619 = vstv %s618
    %v620 = vadd.f32 %v614, %v619
    %v621 = vadd.f32 %v615, %v619
    %v622 = vadd.f32 %v616, %v619
    %v623 = vadd.f32 %v617, %v619
    %v624 = vadd.f32 %v608, %v620
    %v625 = vadd.f32 %v609, %v621
    %v626 = vadd.f32 %v610, %v622
    %v627 = vadd.f32 %v611, %v623
    %v628 = vmin.f32 %v592, %v624
    %v629 = vmin.f32 %v593, %v625
    %v630 = vmin.f32 %v594, %v626
    %v631 = vmin.f32 %v595, %v627
    %s632 = sld [smem:[#allocation2 + $0x40]]
    %v633 = vstv %s632
    %v634 = vmul.f32 %v24, %v633
    %v635 = vmul.f32 %v25, %v633
    %v636 = vmul.f32 %v26, %v633
    %v637 = vmul.f32 %v27, %v633
    %s638 = sld [smem:[#allocation2 + $0x41]]
    %v639 = vstv %s638
    %v640 = vmul.f32 %v30, %v639
    %v641 = vmul.f32 %v31, %v639
    %v642 = vmul.f32 %v32, %v639
    %v643 = vmul.f32 %v33, %v639
    %v644 = vadd.f32 %v634, %v640
    %v645 = vadd.f32 %v635, %v641
    %v646 = vadd.f32 %v636, %v642
    %v647 = vadd.f32 %v637, %v643
    %s648 = sld [smem:[#allocation2 + $0x42]]
    %v649 = vstv %s648
    %v650 = vmul.f32 %v36, %v649
    %v651 = vmul.f32 %v37, %v649
    %v652 = vmul.f32 %v38, %v649
    %v653 = vmul.f32 %v39, %v649
    %s654 = sld [smem:[#allocation2 + $0x43]]
    %v655 = vstv %s654
    %v656 = vadd.f32 %v650, %v655
    %v657 = vadd.f32 %v651, %v655
    %v658 = vadd.f32 %v652, %v655
    %v659 = vadd.f32 %v653, %v655
    %v660 = vadd.f32 %v644, %v656
    %v661 = vadd.f32 %v645, %v657
    %v662 = vadd.f32 %v646, %v658
    %v663 = vadd.f32 %v647, %v659
    %v664 = vmin.f32 %v628, %v660
    %v665 = vmin.f32 %v629, %v661
    %v666 = vmin.f32 %v630, %v662
    %v667 = vmin.f32 %v631, %v663
    %s668 = sld [smem:[#allocation2 + $0x44]]
    %v669 = vstv %s668
    %v670 = vmul.f32 %v24, %v669
    %v671 = vmul.f32 %v25, %v669
    %v672 = vmul.f32 %v26, %v669
    %v673 = vmul.f32 %v27, %v669
    %s674 = sld [smem:[#allocation2 + $0x45]]
    %v675 = vstv %s674
    %v676 = vmul.f32 %v30, %v675
    %v677 = vmul.f32 %v31, %v675
    %v678 = vmul.f32 %v32, %v675
    %v679 = vmul.f32 %v33, %v675
    %v680 = vadd.f32 %v670, %v676
    %v681 = vadd.f32 %v671, %v677
    %v682 = vadd.f32 %v672, %v678
    %v683 = vadd.f32 %v673, %v679
    %s684 = sld [smem:[#allocation2 + $0x46]]
    %v685 = vstv %s684
    %v686 = vmul.f32 %v36, %v685
    %v687 = vmul.f32 %v37, %v685
    %v688 = vmul.f32 %v38, %v685
    %v689 = vmul.f32 %v39, %v685
    %s690 = sld [smem:[#allocation2 + $0x47]]
    %v691 = vstv %s690
    %v692 = vadd.f32 %v686, %v691
    %v693 = vadd.f32 %v687, %v691
    %v694 = vadd.f32 %v688, %v691
    %v695 = vadd.f32 %v689, %v691
    %v696 = vadd.f32 %v680, %v692
    %v697 = vadd.f32 %v681, %v693
    %v698 = vadd.f32 %v682, %v694
    %v699 = vadd.f32 %v683, %v695
    %v700 = vmin.f32 %v664, %v696
    %v701 = vmin.f32 %v665, %v697
    %v702 = vmin.f32 %v666, %v698
    %v703 = vmin.f32 %v667, %v699
    %s704 = sld [smem:[#allocation2 + $0x48]]
    %v705 = vstv %s704
    %v706 = vmul.f32 %v24, %v705
    %v707 = vmul.f32 %v25, %v705
    %v708 = vmul.f32 %v26, %v705
    %v709 = vmul.f32 %v27, %v705
    %s710 = sld [smem:[#allocation2 + $0x49]]
    %v711 = vstv %s710
    %v712 = vmul.f32 %v30, %v711
    %v713 = vmul.f32 %v31, %v711
    %v714 = vmul.f32 %v32, %v711
    %v715 = vmul.f32 %v33, %v711
    %v716 = vadd.f32 %v706, %v712
    %v717 = vadd.f32 %v707, %v713
    %v718 = vadd.f32 %v708, %v714
    %v719 = vadd.f32 %v709, %v715
    %s720 = sld [smem:[#allocation2 + $0x4a]]
    %v721 = vstv %s720
    %v722 = vmul.f32 %v36, %v721
    %v723 = vmul.f32 %v37, %v721
    %v724 = vmul.f32 %v38, %v721
    %v725 = vmul.f32 %v39, %v721
    %s726 = sld [smem:[#allocation2 + $0x4b]]
    %v727 = vstv %s726
    %v728 = vadd.f32 %v722, %v727
    %v729 = vadd.f32 %v723, %v727
    %v730 = vadd.f32 %v724, %v727
    %v731 = vadd.f32 %v725, %v727
    %v732 = vadd.f32 %v716, %v728
    %v733 = vadd.f32 %v717, %v729
    %v734 = vadd.f32 %v718, %v730
    %v735 = vadd.f32 %v719, %v731
    %v736 = vmin.f32 %v700, %v732
    %v737 = vmin.f32 %v701, %v733
    %v738 = vmin.f32 %v702, %v734
    %v739 = vmin.f32 %v703, %v735
    %s740 = sld [smem:[#allocation2 + $0x4c]]
    %v741 = vstv %s740
    %v742 = vmul.f32 %v24, %v741
    %v743 = vmul.f32 %v25, %v741
    %v744 = vmul.f32 %v26, %v741
    %v745 = vmul.f32 %v27, %v741
    %s746 = sld [smem:[#allocation2 + $0x4d]]
    %v747 = vstv %s746
    %v748 = vmul.f32 %v30, %v747
    %v749 = vmul.f32 %v31, %v747
    %v750 = vmul.f32 %v32, %v747
    %v751 = vmul.f32 %v33, %v747
    %v752 = vadd.f32 %v742, %v748
    %v753 = vadd.f32 %v743, %v749
    %v754 = vadd.f32 %v744, %v750
    %v755 = vadd.f32 %v745, %v751
    %s756 = sld [smem:[#allocation2 + $0x4e]]
    %v757 = vstv %s756
    %v758 = vmul.f32 %v36, %v757
    %v759 = vmul.f32 %v37, %v757
    %v760 = vmul.f32 %v38, %v757
    %v761 = vmul.f32 %v39, %v757
    %s762 = sld [smem:[#allocation2 + $0x4f]]
    %v763 = vstv %s762
    %v764 = vadd.f32 %v758, %v763
    %v765 = vadd.f32 %v759, %v763
    %v766 = vadd.f32 %v760, %v763
    %v767 = vadd.f32 %v761, %v763
    %v768 = vadd.f32 %v752, %v764
    %v769 = vadd.f32 %v753, %v765
    %v770 = vadd.f32 %v754, %v766
    %v771 = vadd.f32 %v755, %v767
    %v772 = vmin.f32 %v736, %v768
    %v773 = vmin.f32 %v737, %v769
    %v774 = vmin.f32 %v738, %v770
    %v775 = vmin.f32 %v739, %v771
    %s776 = sld [smem:[#allocation2 + $0x50]]
    %v777 = vstv %s776
    %v778 = vmul.f32 %v24, %v777
    %v779 = vmul.f32 %v25, %v777
    %v780 = vmul.f32 %v26, %v777
    %v781 = vmul.f32 %v27, %v777
    %s782 = sld [smem:[#allocation2 + $0x51]]
    %v783 = vstv %s782
    %v784 = vmul.f32 %v30, %v783
    %v785 = vmul.f32 %v31, %v783
    %v786 = vmul.f32 %v32, %v783
    %v787 = vmul.f32 %v33, %v783
    %v788 = vadd.f32 %v778, %v784
    %v789 = vadd.f32 %v779, %v785
    %v790 = vadd.f32 %v780, %v786
    %v791 = vadd.f32 %v781, %v787
    %s792 = sld [smem:[#allocation2 + $0x52]]
    %v793 = vstv %s792
    %v794 = vmul.f32 %v36, %v793
    %v795 = vmul.f32 %v37, %v793
    %v796 = vmul.f32 %v38, %v793
    %v797 = vmul.f32 %v39, %v793
    %s798 = sld [smem:[#allocation2 + $0x53]]
    %v799 = vstv %s798
    %v800 = vadd.f32 %v794, %v799
    %v801 = vadd.f32 %v795, %v799
    %v802 = vadd.f32 %v796, %v799
    %v803 = vadd.f32 %v797, %v799
    %v804 = vadd.f32 %v788, %v800
    %v805 = vadd.f32 %v789, %v801
    %v806 = vadd.f32 %v790, %v802
    %v807 = vadd.f32 %v791, %v803
    %v808 = vmin.f32 %v772, %v804
    %v809 = vmin.f32 %v773, %v805
    %v810 = vmin.f32 %v774, %v806
    %v811 = vmin.f32 %v775, %v807
    %s812 = sld [smem:[#allocation2 + $0x54]]
    %v813 = vstv %s812
    %v814 = vmul.f32 %v24, %v813
    %v815 = vmul.f32 %v25, %v813
    %v816 = vmul.f32 %v26, %v813
    %v817 = vmul.f32 %v27, %v813
    %s818 = sld [smem:[#allocation2 + $0x55]]
    %v819 = vstv %s818
    %v820 = vmul.f32 %v30, %v819
    %v821 = vmul.f32 %v31, %v819
    %v822 = vmul.f32 %v32, %v819
    %v823 = vmul.f32 %v33, %v819
    %v824 = vadd.f32 %v814, %v820
    %v825 = vadd.f32 %v815, %v821
    %v826 = vadd.f32 %v816, %v822
    %v827 = vadd.f32 %v817, %v823
    %s828 = sld [smem:[#allocation2 + $0x56]]
    %v829 = vstv %s828
    %v830 = vmul.f32 %v36, %v829
    %v831 = vmul.f32 %v37, %v829
    %v832 = vmul.f32 %v38, %v829
    %v833 = vmul.f32 %v39, %v829
    %s834 = sld [smem:[#allocation2 + $0x57]]
    %v835 = vstv %s834
    %v836 = vadd.f32 %v830, %v835
    %v837 = vadd.f32 %v831, %v835
    %v838 = vadd.f32 %v832, %v835
    %v839 = vadd.f32 %v833, %v835
    %v840 = vadd.f32 %v824, %v836
    %v841 = vadd.f32 %v825, %v837
    %v842 = vadd.f32 %v826, %v838
    %v843 = vadd.f32 %v827, %v839
    %v844 = vmin.f32 %v808, %v840
    %v845 = vmin.f32 %v809, %v841
    %v846 = vmin.f32 %v810, %v842
    %v847 = vmin.f32 %v811, %v843
    %s848 = sld [smem:[#allocation2 + $0x58]]
    %v849 = vstv %s848
    %v850 = vmul.f32 %v24, %v849
    %v851 = vmul.f32 %v25, %v849
    %v852 = vmul.f32 %v26, %v849
    %v853 = vmul.f32 %v27, %v849
    %s854 = sld [smem:[#allocation2 + $0x59]]
    %v855 = vstv %s854
    %v856 = vmul.f32 %v30, %v855
    %v857 = vmul.f32 %v31, %v855
    %v858 = vmul.f32 %v32, %v855
    %v859 = vmul.f32 %v33, %v855
    %v860 = vadd.f32 %v850, %v856
    %v861 = vadd.f32 %v851, %v857
    %v862 = vadd.f32 %v852, %v858
    %v863 = vadd.f32 %v853, %v859
    %s864 = sld [smem:[#allocation2 + $0x5a]]
    %v865 = vstv %s864
    %v866 = vmul.f32 %v36, %v865
    %v867 = vmul.f32 %v37, %v865
    %v868 = vmul.f32 %v38, %v865
    %v869 = vmul.f32 %v39, %v865
    %s870 = sld [smem:[#allocation2 + $0x5b]]
    %v871 = vstv %s870
    %v872 = vadd.f32 %v866, %v871
    %v873 = vadd.f32 %v867, %v871
    %v874 = vadd.f32 %v868, %v871
    %v875 = vadd.f32 %v869, %v871
    %v876 = vadd.f32 %v860, %v872
    %v877 = vadd.f32 %v861, %v873
    %v878 = vadd.f32 %v862, %v874
    %v879 = vadd.f32 %v863, %v875
    %v880 = vmin.f32 %v844, %v876
    %v881 = vmin.f32 %v845, %v877
    %v882 = vmin.f32 %v846, %v878
    %v883 = vmin.f32 %v847, %v879
    %s884 = sld [smem:[#allocation2 + $0x5c]]
    %v885 = vstv %s884
    %v886 = vmul.f32 %v24, %v885
    %v887 = vmul.f32 %v25, %v885
    %v888 = vmul.f32 %v26, %v885
    %v889 = vmul.f32 %v27, %v885
    %s890 = sld [smem:[#allocation2 + $0x5d]]
    %v891 = vstv %s890
    %v892 = vmul.f32 %v30, %v891
    %v893 = vmul.f32 %v31, %v891
    %v894 = vmul.f32 %v32, %v891
    %v895 = vmul.f32 %v33, %v891
    %v896 = vadd.f32 %v886, %v892
    %v897 = vadd.f32 %v887, %v893
    %v898 = vadd.f32 %v888, %v894
    %v899 = vadd.f32 %v889, %v895
    %s900 = sld [smem:[#allocation2 + $0x5e]]
    %v901 = vstv %s900
    %v902 = vmul.f32 %v36, %v901
    %v903 = vmul.f32 %v37, %v901
    %v904 = vmul.f32 %v38, %v901
    %v905 = vmul.f32 %v39, %v901
    %s906 = sld [smem:[#allocation2 + $0x5f]]
    %v907 = vstv %s906
    %v908 = vadd.f32 %v902, %v907
    %v909 = vadd.f32 %v903, %v907
    %v910 = vadd.f32 %v904, %v907
    %v911 = vadd.f32 %v905, %v907
    %v912 = vadd.f32 %v896, %v908
    %v913 = vadd.f32 %v897, %v909
    %v914 = vadd.f32 %v898, %v910
    %v915 = vadd.f32 %v899, %v911
    %v916 = vmin.f32 %v880, %v912
    %v917 = vmin.f32 %v881, %v913
    %v918 = vmin.f32 %v882, %v914
    %v919 = vmin.f32 %v883, %v915
    %s920 = sld [smem:[#allocation2 + $0x60]]
    %v921 = vstv %s920
    %v922 = vmul.f32 %v24, %v921
    %v923 = vmul.f32 %v25, %v921
    %v924 = vmul.f32 %v26, %v921
    %v925 = vmul.f32 %v27, %v921
    %s926 = sld [smem:[#allocation2 + $0x61]]
    %v927 = vstv %s926
    %v928 = vmul.f32 %v30, %v927
    %v929 = vmul.f32 %v31, %v927
    %v930 = vmul.f32 %v32, %v927
    %v931 = vmul.f32 %v33, %v927
    %v932 = vadd.f32 %v922, %v928
    %v933 = vadd.f32 %v923, %v929
    %v934 = vadd.f32 %v924, %v930
    %v935 = vadd.f32 %v925, %v931
    %s936 = sld [smem:[#allocation2 + $0x62]]
    %v937 = vstv %s936
    %v938 = vmul.f32 %v36, %v937
    %v939 = vmul.f32 %v37, %v937
    %v940 = vmul.f32 %v38, %v937
    %v941 = vmul.f32 %v39, %v937
    %s942 = sld [smem:[#allocation2 + $0x63]]
    %v943 = vstv %s942
    %v944 = vadd.f32 %v938, %v943
    %v945 = vadd.f32 %v939, %v943
    %v946 = vadd.f32 %v940, %v943
    %v947 = vadd.f32 %v941, %v943
    %v948 = vadd.f32 %v932, %v944
    %v949 = vadd.f32 %v933, %v945
    %v950 = vadd.f32 %v934, %v946
    %v951 = vadd.f32 %v935, %v947
    %v952 = vmin.f32 %v916, %v948
    %v953 = vmin.f32 %v917, %v949
    %v954 = vmin.f32 %v918, %v950
    %v955 = vmin.f32 %v919, %v951
    %s956 = sld [smem:[#allocation2 + $0x64]]
    %v957 = vstv %s956
    %v958 = vmul.f32 %v24, %v957
    %v959 = vmul.f32 %v25, %v957
    %v960 = vmul.f32 %v26, %v957
    %v961 = vmul.f32 %v27, %v957
    %s962 = sld [smem:[#allocation2 + $0x65]]
    %v963 = vstv %s962
    %v964 = vmul.f32 %v30, %v963
    %v965 = vmul.f32 %v31, %v963
    %v966 = vmul.f32 %v32, %v963
    %v967 = vmul.f32 %v33, %v963
    %v968 = vadd.f32 %v958, %v964
    %v969 = vadd.f32 %v959, %v965
    %v970 = vadd.f32 %v960, %v966
    %v971 = vadd.f32 %v961, %v967
    %s972 = sld [smem:[#allocation2 + $0x66]]
    %v973 = vstv %s972
    %v974 = vmul.f32 %v36, %v973
    %v975 = vmul.f32 %v37, %v973
    %v976 = vmul.f32 %v38, %v973
    %v977 = vmul.f32 %v39, %v973
    %s978 = sld [smem:[#allocation2 + $0x67]]
    %v979 = vstv %s978
    %v980 = vadd.f32 %v974, %v979
    %v981 = vadd.f32 %v975, %v979
    %v982 = vadd.f32 %v976, %v979
    %v983 = vadd.f32 %v977, %v979
    %v984 = vadd.f32 %v968, %v980
    %v985 = vadd.f32 %v969, %v981
    %v986 = vadd.f32 %v970, %v982
    %v987 = vadd.f32 %v971, %v983
    %v988 = vmin.f32 %v952, %v984
    %v989 = vmin.f32 %v953, %v985
    %v990 = vmin.f32 %v954, %v986
    %v991 = vmin.f32 %v955, %v987
    %s992 = sld [smem:[#allocation2 + $0x68]]
    %v993 = vstv %s992
    %v994 = vmul.f32 %v24, %v993
    %v995 = vmul.f32 %v25, %v993
    %v996 = vmul.f32 %v26, %v993
    %v997 = vmul.f32 %v27, %v993
    %s998 = sld [smem:[#allocation2 + $0x69]]
    %v999 = vstv %s998
    %v1000 = vmul.f32 %v30, %v999
    %v1001 = vmul.f32 %v31, %v999
    %v1002 = vmul.f32 %v32, %v999
    %v1003 = vmul.f32 %v33, %v999
    %v1004 = vadd.f32 %v994, %v1000
    %v1005 = vadd.f32 %v995, %v1001
    %v1006 = vadd.f32 %v996, %v1002
    %v1007 = vadd.f32 %v997, %v1003
    %s1008 = sld [smem:[#allocation2 + $0x6a]]
    %v1009 = vstv %s1008
    %v1010 = vmul.f32 %v36, %v1009
    %v1011 = vmul.f32 %v37, %v1009
    %v1012 = vmul.f32 %v38, %v1009
    %v1013 = vmul.f32 %v39, %v1009
    %s1014 = sld [smem:[#allocation2 + $0x6b]]
    %v1015 = vstv %s1014
    %v1016 = vadd.f32 %v1010, %v1015
    %v1017 = vadd.f32 %v1011, %v1015
    %v1018 = vadd.f32 %v1012, %v1015
    %v1019 = vadd.f32 %v1013, %v1015
    %v1020 = vadd.f32 %v1004, %v1016
    %v1021 = vadd.f32 %v1005, %v1017
    %v1022 = vadd.f32 %v1006, %v1018
    %v1023 = vadd.f32 %v1007, %v1019
    %v1024 = vmin.f32 %v988, %v1020
    %v1025 = vmin.f32 %v989, %v1021
    %v1026 = vmin.f32 %v990, %v1022
    %v1027 = vmin.f32 %v991, %v1023
    %s1028 = sld [smem:[#allocation2 + $0x6c]]
    %v1029 = vstv %s1028
    %v1030 = vmul.f32 %v24, %v1029
    %v1031 = vmul.f32 %v25, %v1029
    %v1032 = vmul.f32 %v26, %v1029
    %v1033 = vmul.f32 %v27, %v1029
    %s1034 = sld [smem:[#allocation2 + $0x6d]]
    %v1035 = vstv %s1034
    %v1036 = vmul.f32 %v30, %v1035
    %v1037 = vmul.f32 %v31, %v1035
    %v1038 = vmul.f32 %v32, %v1035
    %v1039 = vmul.f32 %v33, %v1035
    %v1040 = vadd.f32 %v1030, %v1036
    %v1041 = vadd.f32 %v1031, %v1037
    %v1042 = vadd.f32 %v1032, %v1038
    %v1043 = vadd.f32 %v1033, %v1039
    %s1044 = sld [smem:[#allocation2 + $0x6e]]
    %v1045 = vstv %s1044
    %v1046 = vmul.f32 %v36, %v1045
    %v1047 = vmul.f32 %v37, %v1045
    %v1048 = vmul.f32 %v38, %v1045
    %v1049 = vmul.f32 %v39, %v1045
    %s1050 = sld [smem:[#allocation2 + $0x6f]]
    %v1051 = vstv %s1050
    %v1052 = vadd.f32 %v1046, %v1051
    %v1053 = vadd.f32 %v1047, %v1051
    %v1054 = vadd.f32 %v1048, %v1051
    %v1055 = vadd.f32 %v1049, %v1051
    %v1056 = vadd.f32 %v1040, %v1052
    %v1057 = vadd.f32 %v1041, %v1053
    %v1058 = vadd.f32 %v1042, %v1054
    %v1059 = vadd.f32 %v1043, %v1055
    %v1060 = vmin.f32 %v1024, %v1056
    %v1061 = vmin.f32 %v1025, %v1057
    %v1062 = vmin.f32 %v1026, %v1058
    %v1063 = vmin.f32 %v1027, %v1059
    %s1064 = sld [smem:[#allocation2 + $0x70]]
    %v1065 = vstv %s1064
    %v1066 = vmul.f32 %v24, %v1065
    %v1067 = vmul.f32 %v25, %v1065
    %v1068 = vmul.f32 %v26, %v1065
    %v1069 = vmul.f32 %v27, %v1065
    %s1070 = sld [smem:[#allocation2 + $0x71]]
    %v1071 = vstv %s1070
    %v1072 = vmul.f32 %v30, %v1071
    %v1073 = vmul.f32 %v31, %v1071
    %v1074 = vmul.f32 %v32, %v1071
    %v1075 = vmul.f32 %v33, %v1071
    %v1076 = vadd.f32 %v1066, %v1072
    %v1077 = vadd.f32 %v1067, %v1073
    %v1078 = vadd.f32 %v1068, %v1074
    %v1079 = vadd.f32 %v1069, %v1075
    %s1080 = sld [smem:[#allocation2 + $0x72]]
    %v1081 = vstv %s1080
    %v1082 = vmul.f32 %v36, %v1081
    %v1083 = vmul.f32 %v37, %v1081
    %v1084 = vmul.f32 %v38, %v1081
    %v1085 = vmul.f32 %v39, %v1081
    %s1086 = sld [smem:[#allocation2 + $0x73]]
    %v1087 = vstv %s1086
    %v1088 = vadd.f32 %v1082, %v1087
    %v1089 = vadd.f32 %v1083, %v1087
    %v1090 = vadd.f32 %v1084, %v1087
    %v1091 = vadd.f32 %v1085, %v1087
    %v1092 = vadd.f32 %v1076, %v1088
    %v1093 = vadd.f32 %v1077, %v1089
    %v1094 = vadd.f32 %v1078, %v1090
    %v1095 = vadd.f32 %v1079, %v1091
    %v1096 = vmin.f32 %v1060, %v1092
    %v1097 = vmin.f32 %v1061, %v1093
    %v1098 = vmin.f32 %v1062, %v1094
    %v1099 = vmin.f32 %v1063, %v1095
    %s1100 = sld [smem:[#allocation2 + $0x74]]
    %v1101 = vstv %s1100
    %v1102 = vmul.f32 %v24, %v1101
    %v1103 = vmul.f32 %v25, %v1101
    %v1104 = vmul.f32 %v26, %v1101
    %v1105 = vmul.f32 %v27, %v1101
    %s1106 = sld [smem:[#allocation2 + $0x75]]
    %v1107 = vstv %s1106
    %v1108 = vmul.f32 %v30, %v1107
    %v1109 = vmul.f32 %v31, %v1107
    %v1110 = vmul.f32 %v32, %v1107
    %v1111 = vmul.f32 %v33, %v1107
    %v1112 = vadd.f32 %v1102, %v1108
    %v1113 = vadd.f32 %v1103, %v1109
    %v1114 = vadd.f32 %v1104, %v1110
    %v1115 = vadd.f32 %v1105, %v1111
    %s1116 = sld [smem:[#allocation2 + $0x76]]
    %v1117 = vstv %s1116
    %v1118 = vmul.f32 %v36, %v1117
    %v1119 = vmul.f32 %v37, %v1117
    %v1120 = vmul.f32 %v38, %v1117
    %v1121 = vmul.f32 %v39, %v1117
    %s1122 = sld [smem:[#allocation2 + $0x77]]
    %v1123 = vstv %s1122
    %v1124 = vadd.f32 %v1118, %v1123
    %v1125 = vadd.f32 %v1119, %v1123
    %v1126 = vadd.f32 %v1120, %v1123
    %v1127 = vadd.f32 %v1121, %v1123
    %v1128 = vadd.f32 %v1112, %v1124
    %v1129 = vadd.f32 %v1113, %v1125
    %v1130 = vadd.f32 %v1114, %v1126
    %v1131 = vadd.f32 %v1115, %v1127
    %v1132 = vmin.f32 %v1096, %v1128
    %v1133 = vmin.f32 %v1097, %v1129
    %v1134 = vmin.f32 %v1098, %v1130
    %v1135 = vmin.f32 %v1099, %v1131
    %v1136 = vadd.f32 %v56, %v1132
    %v1137 = vadd.f32 %v57, %v1133
    %v1138 = vadd.f32 %v58, %v1134
    %v1139 = vadd.f32 %v59, %v1135
    %v1140 = vmax.f32 %v1136, 0.0
    %v1141 = vmax.f32 %v1137, 0.0
    %v1142 = vmax.f32 %v1138, 0.0
    %v1143 = vmax.f32 %v1139, 0.0
    %v1144 = vrsqrt.pop %v1140
    %v1145 = vmul.f32 %v1140, %v1144
    %vm1146 = vcmp.eq.f32.partialorder %v1140, inf
    %v1147 = vsel %vm1146, %v1140, %v1145
    %vm1148 = vcmp.eq.f32.partialorder %v1140, 0.0
    %v1149 = vand.u32 %v1140, 2147483648
    %v1150 = vsel %vm1148, %v1149, %v1147
    %v1151 = vrsqrt.pop %v1141
    %v1152 = vmul.f32 %v1141, %v1151
    %vm1153 = vcmp.eq.f32.partialorder %v1141, inf
    %v1154 = vsel %vm1153, %v1141, %v1152
    %vm1155 = vcmp.eq.f32.partialorder %v1141, 0.0
    %v1156 = vand.u32 %v1141, 2147483648
    %v1157 = vsel %vm1155, %v1156, %v1154
    %v1158 = vrsqrt.pop %v1142
    %v1159 = vmul.f32 %v1142, %v1158
    %vm1160 = vcmp.eq.f32.partialorder %v1142, inf
    %v1161 = vsel %vm1160, %v1142, %v1159
    %vm1162 = vcmp.eq.f32.partialorder %v1142, 0.0
    %v1163 = vand.u32 %v1142, 2147483648
    %v1164 = vsel %vm1162, %v1163, %v1161
    %v1165 = vrsqrt.pop %v1143
    %v1166 = vmul.f32 %v1143, %v1165
    %vm1167 = vcmp.eq.f32.partialorder %v1143, inf
    %v1168 = vsel %vm1167, %v1143, %v1166
    %vm1169 = vcmp.eq.f32.partialorder %v1143, 0.0
    %v1170 = vand.u32 %v1143, 2147483648
    %v1171 = vsel %vm1169, %v1170, %v1168
    %v1172 = vadd.f32 %v1150, %v1157
    %v1173 = vadd.f32 %v1172, %v1164
    %v1174 = vadd.f32 %v1173, %v1171
    %v1175 = vadd.f32 %v1174, 0.0
    %1176 = vst [vmem:[%s2] sm:$0xff] %v1175
    // Predicated region
    $region14: #{nps_score.1} parent=1 // pred_check
      _
    $region15: #{nps_score.1} parent=1 // pred_check_branch
      %1178 = sbr.rel (0) target = $region17
    $region16: #{nps_score.1} parent=1 // pred_region
      _
    $region17: #{nps_score.1} parent=1 // pred_fallthru
      _
    // Predicated region
    $region18: #{nps_score.1} parent=1 // pred_check
      _
    $region19: #{nps_score.1} parent=1 // pred_check_branch
      %1180 = sbr.rel (0) target = $region21
    $region20: #{nps_score.1} parent=1 // pred_region
      _
    $region21: #{nps_score.1} parent=1 // pred_fallthru
      _
    %1181 = vsyncpa [#allocation3], 1

</llo_original>
